<compile_context>
chip_gen: v7x
topology: tpu7x:2x2x1
jax: 0.10.0
libtpu: 0.0.40
codegen_flags: <defaults>
</compile_context>

<pallas_src>
import functools

import jax
import jax.numpy as jnp
from jax import lax
from jax.experimental import pallas as pl
from jax.experimental.pallas import tpu as pltpu

BN_EPS = 1e-5
POOL_K = 5
POOL_S = 2
CONV2_K = 2
LANE = 128
_MIN_SCOPED_VMEM = 16 * 1024 * 1024  # v5e default scoped VMEM (most restrictive)


def _aux_head_kernel(x_ref, w1_ref, g1_ref, b1_ref, w2_ref, g2_ref, b2_ref,
                     fcw_ref, fcb_ref, o_ref):
    """Fused ReLU -> AvgPool5x5/2 -> 1x1 conv -> BN -> ReLU -> 2x2 conv -> BN
    -> ReLU -> Linear (lane-padded output).  All shapes are static; the Python
    loops unroll at trace time."""
    N, H, W, C = x_ref.shape
    C1 = w1_ref.shape[1]                         # 128
    H1 = (H - POOL_K) // POOL_S + 1
    W1 = (W - POOL_K) // POOL_S + 1
    P = H1 * W1                                  # == CONV2_K**2 (wrapper-enforced)

    # ---- ReLU (f32, VPU) ----------------------------------------------------
    xr = jnp.maximum(x_ref[...], 0.0)

    # ---- AvgPool2d(5, stride=2, pad=0), separable ---------------------------
    # padding=0 => window count is always 25; the 1/25 scale is folded into w1
    # at prep time (exact: the 1x1 conv is linear).  Row partial sums are
    # computed once per output row and reused across overlapping windows.
    row_sums = []
    for i in range(H1):
        rs = xr[:, i * POOL_S, :, :]
        for kh in range(1, POOL_K):
            rs = rs + xr[:, i * POOL_S + kh, :, :]
        row_sums.append(rs)                      # (N, W, C)

    pooled = []                                  # n-major row ordering: (n, i, j)
    for i in range(H1):
        for j in range(W1):
            s = row_sums[i][:, j * POOL_S, :]
            for kw in range(1, POOL_K):
                s = s + row_sums[i][:, j * POOL_S + kw, :]
            pooled.append(s[:, None, :])         # (N, 1, C)
    # (N, P, C) -> (N*P, C); lane dim untouched, rows ordered (n, i, j).
    a1 = jnp.concatenate(pooled, axis=1).reshape(N * P, C)

    # ---- Conv2d(C, 128, 1) as matmul (f32 acc) + BN(batch stats) + ReLU -----
    h1 = jnp.dot(a1, w1_ref[...], preferred_element_type=jnp.float32)   # (N*P, 128)
    mu1 = jnp.mean(h1, axis=0, keepdims=True)
    d1 = h1 - mu1
    var1 = jnp.mean(d1 * d1, axis=0, keepdims=True)                     # biased var
    h1 = jnp.maximum(d1 * lax.rsqrt(var1 + BN_EPS) * g1_ref[...] + b1_ref[...], 0.0)

    # ---- Conv2d(128, 768, 2) over the full (H1==W1==2) map -> 1x1 output ----
    # n-major rows make the im2col a contiguous regroup: split the leading dim
    # (lane dim untouched) and concatenate the P taps along lanes.  Tap order
    # p = kh*W1 + kw matches w2's (kh, kw, cin) row blocks built at prep time.
    h1_3d = h1.reshape(N, P, C1)
    a2 = jnp.concatenate([h1_3d[:, p, :] for p in range(P)], axis=1)    # (N, 512)

    h2 = jnp.dot(a2, w2_ref[...], preferred_element_type=jnp.float32)   # (N, 768)
    mu2 = jnp.mean(h2, axis=0, keepdims=True)
    d2 = h2 - mu2
    var2 = jnp.mean(d2 * d2, axis=0, keepdims=True)
    h2 = jnp.maximum(d2 * lax.rsqrt(var2 + BN_EPS) * g2_ref[...] + b2_ref[...], 0.0)

    # ---- classifier: Linear(768, num_classes), lane-padded width ------------
    o_ref[...] = jnp.dot(h2, fcw_ref[...],
                         preferred_element_type=jnp.float32) + fcb_ref[...]


def prepare_params(params):
    """One-time parameter layout preparation (NOT on the per-call hot path).

    Returns (prepared_param_dict, num_classes)."""
    C1 = params['conv1_w'].shape[0]              # 128
    C2 = params['conv2_w'].shape[0]              # 768
    ncls = params['fc_w'].shape[0]
    ncls_pad = max(LANE, ((ncls + LANE - 1) // LANE) * LANE)

    inv_cnt = 1.0 / float(POOL_K * POOL_K)
    # 1x1 conv: (C1, C, 1, 1) -> (C, C1); fold the 1/25 avg-pool scale in.
    w1 = (jnp.transpose(params['conv1_w'][:, :, 0, 0], (1, 0)) * inv_cnt
          ).astype(jnp.float32)
    # 2x2 conv: (C2, C1, kh, kw) -> (kh, kw, C1, C2) -> (4*C1, C2); row blocks
    # match the kernel's tap order p = kh*2 + kw.
    w2 = jnp.transpose(params['conv2_w'], (2, 3, 1, 0)).reshape(
        CONV2_K * CONV2_K * C1, C2).astype(jnp.float32)
    # classifier, padded to a 128-multiple lane width (padding lives in VMEM only).
    fcw = jnp.zeros((C2, ncls_pad), jnp.float32).at[:, :ncls].set(
        jnp.transpose(params['fc_w'], (1, 0)).astype(jnp.float32))
    fcb = jnp.zeros((1, ncls_pad), jnp.float32).at[0, :ncls].set(
        params['fc_b'].astype(jnp.float32))

    prep = {
        'w1': w1, 'w2': w2, 'fcw': fcw, 'fcb': fcb,
        'g1': params['bn1_g'].reshape(1, C1).astype(jnp.float32),
        'b1': params['bn1_b'].reshape(1, C1).astype(jnp.float32),
        'g2': params['bn2_g'].reshape(1, C2).astype(jnp.float32),
        'b2': params['bn2_b'].reshape(1, C2).astype(jnp.float32),
    }
    return jax.device_put(prep), ncls


@functools.partial(jax.jit, static_argnames=("num_classes",))
def aux_head_imagenet_forward(prep, x_nhwc, *, num_classes):
    """AuxiliaryHeadImageNet.forward on NHWC activations.

    BatchNorm uses training-mode batch statistics (behaviour of a freshly
    constructed nn.Module in train mode).
    # TODO(synk): eval-mode running_mean/running_var are not plumbed in; doing
    # so would also allow grid-tiling the batch axis (2x on v7x).
    """
    x = x_nhwc.astype(jnp.float32)
    N, H, W, C = x.shape
    H1 = (H - POOL_K) // POOL_S + 1
    W1 = (W - POOL_K) // POOL_S + 1
    if H1 != CONV2_K or W1 != CONV2_K:
        # The module's nn.Linear(768, num_classes) only type-checks when the
        # features end at 1x1 spatial (e.g. 7x7 or 8x8 inputs).
        raise ValueError(
            f"features end at {H1 - CONV2_K + 1}x{W1 - CONV2_K + 1} spatial; "
            "classifier needs 1x1 (use a 7x7 or 8x8 input)")

    w1, w2, fcw, fcb = prep['w1'], prep['w2'], prep['fcw'], prep['fcb']
    g1, b1, g2, b2 = prep['g1'], prep['b1'], prep['g2'], prep['b2']
    C1, C2, ncls_pad = w1.shape[1], w2.shape[1], fcw.shape[1]

    operands = (x, w1, g1, b1, w2, g2, b2, fcw, fcb)
    in_bytes = sum(int(a.size) * a.dtype.itemsize for a in operands)
    out_bytes = N * ncls_pad * 4

    # VMEM budget: training-mode BN statistics span the whole batch, so the
    # batch must stay resident in one invocation.  Fail loudly (rather than
    # OOM) if that ever stops fitting the most restrictive scoped-VMEM default.
    vmem_bytes = 2 * (in_bytes + out_bytes)      # conservative double-buffer count
    if vmem_bytes > _MIN_SCOPED_VMEM:
        raise ValueError(
            f"~{vmem_bytes >> 20} MiB VMEM footprint; tile the batch "
            "(requires eval-mode BN) or raise vmem_limit_bytes")

    M1 = N * H1 * W1
    cost = pl.CostEstimate(
        flops=2 * (M1 * C * C1 + N * (CONV2_K * CONV2_K * C1) * C2
                   + N * C2 * ncls_pad),
        transcendentals=C1 + C2,                 # the two BN rsqrt vectors
        bytes_accessed=in_bytes + out_bytes)

    def full_block(shape):
        n = len(shape)
        return pl.BlockSpec(shape, lambda i, _n=n: (0,) * _n)

    logits_pad = pl.pallas_call(
        _aux_head_kernel,
        out_shape=jax.ShapeDtypeStruct((N, ncls_pad), jnp.float32),
        grid=(1,),
        in_specs=[full_block(a.shape) for a in operands],
        out_specs=full_block((N, ncls_pad)),
        compiler_params=pltpu.CompilerParams(
            dimension_semantics=("arbitrary",)),
        cost_estimate=cost,
    )(*operands)

    return logits_pad[:, :num_classes]


if __name__ == "__main__":
    # Small but consistent shapes: the aux head's Linear(768, num_classes)
    # requires the features to end at 1x1 spatial, so use an 8x8 input
    # (8 -> AvgPool(5, s=2) -> 2 -> Conv 2x2 -> 1).
    N, C_in, H, W = 2, 128, 8, 8
    num_classes = 10

    key = jax.random.PRNGKey(0)
    ks = jax.random.split(key, 9)
    params = {
        'conv1_w': 0.10 * jax.random.normal(ks[0], (128, C_in, 1, 1), jnp.float32),
        'bn1_g':   1.0 + 0.10 * jax.random.normal(ks[1], (128,), jnp.float32),
        'bn1_b':   0.10 * jax.random.normal(ks[2], (128,), jnp.float32),
        'conv2_w': 0.05 * jax.random.normal(ks[3], (768, 128, 2, 2), jnp.float32),
        'bn2_g':   1.0 + 0.10 * jax.random.normal(ks[4], (768,), jnp.float32),
        'bn2_b':   0.10 * jax.random.normal(ks[5], (768,), jnp.float32),
        'fc_w':    0.05 * jax.random.normal(ks[6], (num_classes, 768), jnp.float32),
        'fc_b':    0.01 * jax.random.normal(ks[7], (num_classes,), jnp.float32),
    }
    # Module-spec layout is NCHW; the kernel's hot path takes NHWC.  Convert
    # once here (producer glue) — not inside the per-call forward.
    x_nchw = jax.random.normal(ks[8], (N, C_in, H, W), jnp.float32)
    x_nhwc = jnp.transpose(x_nchw, (0, 2, 3, 1))

    prep, ncls = prepare_params(params)
    logits = aux_head_imagenet_forward(prep, x_nhwc, num_classes=ncls)
    jax.block_until_ready(logits)
    assert logits.shape == (N, num_classes), logits.shape
    assert bool(jnp.all(jnp.isfinite(logits)))
    print("KERNEL_OK")
</pallas_src>

<mosaic_0001>
module attributes {stable_mosaic.version = 11 : i64} {
  func.func @_aux_head_kernel(%arg0: i32, %arg1: memref<2x8x8x128xf32, #tpu.memory_space<vmem>>, %arg2: memref<128x128xf32, #tpu.memory_space<vmem>>, %arg3: memref<1x128xf32, #tpu.memory_space<vmem>>, %arg4: memref<1x128xf32, #tpu.memory_space<vmem>>, %arg5: memref<512x768xf32, #tpu.memory_space<vmem>>, %arg6: memref<1x768xf32, #tpu.memory_space<vmem>>, %arg7: memref<1x768xf32, #tpu.memory_space<vmem>>, %arg8: memref<768x128xf32, #tpu.memory_space<vmem>>, %arg9: memref<1x128xf32, #tpu.memory_space<vmem>>, %arg10: memref<2x128xf32, #tpu.memory_space<vmem>>) attributes {dimension_semantics = [#tpu.dimension_semantics<arbitrary>], iteration_bounds = array<i64: 1>, scalar_prefetch = 0 : i64, scratch_operands = 0 : i64, tpu.core_type = #tpu.core_type<tc>, window_params = [{pipeline_mode = #tpu.pipeline_mode<synchronous>, transform_indices = @transform_0, window_bounds = array<i64: 2, 8, 8, 128>}, {pipeline_mode = #tpu.pipeline_mode<synchronous>, transform_indices = @transform_1, window_bounds = array<i64: 128, 128>}, {pipeline_mode = #tpu.pipeline_mode<synchronous>, transform_indices = @transform_2, window_bounds = array<i64: 1, 128>}, {pipeline_mode = #tpu.pipeline_mode<synchronous>, transform_indices = @transform_3, window_bounds = array<i64: 1, 128>}, {pipeline_mode = #tpu.pipeline_mode<synchronous>, transform_indices = @transform_4, window_bounds = array<i64: 512, 768>}, {pipeline_mode = #tpu.pipeline_mode<synchronous>, transform_indices = @transform_5, window_bounds = array<i64: 1, 768>}, {pipeline_mode = #tpu.pipeline_mode<synchronous>, transform_indices = @transform_6, window_bounds = array<i64: 1, 768>}, {pipeline_mode = #tpu.pipeline_mode<synchronous>, transform_indices = @transform_7, window_bounds = array<i64: 768, 128>}, {pipeline_mode = #tpu.pipeline_mode<synchronous>, transform_indices = @transform_8, window_bounds = array<i64: 1, 128>}, {pipeline_mode = #tpu.pipeline_mode<synchronous>, transform_indices = @transform_9, window_bounds = array<i64: 2, 128>}]} {
    %c0 = arith.constant 0 : index
    %c0_0 = arith.constant 0 : index
    %c0_1 = arith.constant 0 : index
    %c0_2 = arith.constant 0 : index
    %0 = vector.load %arg1[%c0, %c0_0, %c0_1, %c0_2] : memref<2x8x8x128xf32, #tpu.memory_space<vmem>>, vector<2x8x8x128xf32>
    %cst = arith.constant 0.000000e+00 : f32
    %1 = vector.broadcast %cst : f32 to vector<2x8x8x128xf32>
    %2 = arith.maximumf %0, %1 : vector<2x8x8x128xf32>
    %3 = vector.extract_strided_slice %2 {offsets = [0, 0, 0, 0], sizes = [2, 1, 8, 128], strides = [1, 1, 1, 1]} : vector<2x8x8x128xf32> to vector<2x1x8x128xf32>
    %4 = vector.shape_cast %3 : vector<2x1x8x128xf32> to vector<2x8x128xf32>
    %5 = vector.extract_strided_slice %2 {offsets = [0, 1, 0, 0], sizes = [2, 1, 8, 128], strides = [1, 1, 1, 1]} : vector<2x8x8x128xf32> to vector<2x1x8x128xf32>
    %6 = vector.shape_cast %5 : vector<2x1x8x128xf32> to vector<2x8x128xf32>
    %7 = arith.addf %4, %6 : vector<2x8x128xf32>
    %8 = vector.extract_strided_slice %2 {offsets = [0, 2, 0, 0], sizes = [2, 1, 8, 128], strides = [1, 1, 1, 1]} : vector<2x8x8x128xf32> to vector<2x1x8x128xf32>
    %9 = vector.shape_cast %8 : vector<2x1x8x128xf32> to vector<2x8x128xf32>
    %10 = arith.addf %7, %9 : vector<2x8x128xf32>
    %11 = vector.extract_strided_slice %2 {offsets = [0, 3, 0, 0], sizes = [2, 1, 8, 128], strides = [1, 1, 1, 1]} : vector<2x8x8x128xf32> to vector<2x1x8x128xf32>
    %12 = vector.shape_cast %11 : vector<2x1x8x128xf32> to vector<2x8x128xf32>
    %13 = arith.addf %10, %12 : vector<2x8x128xf32>
    %14 = vector.extract_strided_slice %2 {offsets = [0, 4, 0, 0], sizes = [2, 1, 8, 128], strides = [1, 1, 1, 1]} : vector<2x8x8x128xf32> to vector<2x1x8x128xf32>
    %15 = vector.shape_cast %14 : vector<2x1x8x128xf32> to vector<2x8x128xf32>
    %16 = arith.addf %13, %15 : vector<2x8x128xf32>
    %17 = vector.extract_strided_slice %2 {offsets = [0, 2, 0, 0], sizes = [2, 1, 8, 128], strides = [1, 1, 1, 1]} : vector<2x8x8x128xf32> to vector<2x1x8x128xf32>
    %18 = vector.shape_cast %17 : vector<2x1x8x128xf32> to vector<2x8x128xf32>
    %19 = vector.extract_strided_slice %2 {offsets = [0, 3, 0, 0], sizes = [2, 1, 8, 128], strides = [1, 1, 1, 1]} : vector<2x8x8x128xf32> to vector<2x1x8x128xf32>
    %20 = vector.shape_cast %19 : vector<2x1x8x128xf32> to vector<2x8x128xf32>
    %21 = arith.addf %18, %20 : vector<2x8x128xf32>
    %22 = vector.extract_strided_slice %2 {offsets = [0, 4, 0, 0], sizes = [2, 1, 8, 128], strides = [1, 1, 1, 1]} : vector<2x8x8x128xf32> to vector<2x1x8x128xf32>
    %23 = vector.shape_cast %22 : vector<2x1x8x128xf32> to vector<2x8x128xf32>
    %24 = arith.addf %21, %23 : vector<2x8x128xf32>
    %25 = vector.extract_strided_slice %2 {offsets = [0, 5, 0, 0], sizes = [2, 1, 8, 128], strides = [1, 1, 1, 1]} : vector<2x8x8x128xf32> to vector<2x1x8x128xf32>
    %26 = vector.shape_cast %25 : vector<2x1x8x128xf32> to vector<2x8x128xf32>
    %27 = arith.addf %24, %26 : vector<2x8x128xf32>
    %28 = vector.extract_strided_slice %2 {offsets = [0, 6, 0, 0], sizes = [2, 1, 8, 128], strides = [1, 1, 1, 1]} : vector<2x8x8x128xf32> to vector<2x1x8x128xf32>
    %29 = vector.shape_cast %28 : vector<2x1x8x128xf32> to vector<2x8x128xf32>
    %30 = arith.addf %27, %29 : vector<2x8x128xf32>
    %31 = vector.extract_strided_slice %16 {offsets = [0, 0, 0], sizes = [2, 1, 128], strides = [1, 1, 1]} : vector<2x8x128xf32> to vector<2x1x128xf32>
    %32 = vector.shape_cast %31 : vector<2x1x128xf32> to vector<2x128xf32>
    %33 = vector.extract_strided_slice %16 {offsets = [0, 1, 0], sizes = [2, 1, 128], strides = [1, 1, 1]} : vector<2x8x128xf32> to vector<2x1x128xf32>
    %34 = vector.shape_cast %33 : vector<2x1x128xf32> to vector<2x128xf32>
    %35 = arith.addf %32, %34 : vector<2x128xf32>
    %36 = vector.extract_strided_slice %16 {offsets = [0, 2, 0], sizes = [2, 1, 128], strides = [1, 1, 1]} : vector<2x8x128xf32> to vector<2x1x128xf32>
    %37 = vector.shape_cast %36 : vector<2x1x128xf32> to vector<2x128xf32>
    %38 = arith.addf %35, %37 : vector<2x128xf32>
    %39 = vector.extract_strided_slice %16 {offsets = [0, 3, 0], sizes = [2, 1, 128], strides = [1, 1, 1]} : vector<2x8x128xf32> to vector<2x1x128xf32>
    %40 = vector.shape_cast %39 : vector<2x1x128xf32> to vector<2x128xf32>
    %41 = arith.addf %38, %40 : vector<2x128xf32>
    %42 = vector.extract_strided_slice %16 {offsets = [0, 4, 0], sizes = [2, 1, 128], strides = [1, 1, 1]} : vector<2x8x128xf32> to vector<2x1x128xf32>
    %43 = vector.shape_cast %42 : vector<2x1x128xf32> to vector<2x128xf32>
    %44 = arith.addf %41, %43 : vector<2x128xf32>
    %45 = vector.shape_cast %44 : vector<2x128xf32> to vector<2x1x128xf32>
    %46 = vector.extract_strided_slice %16 {offsets = [0, 2, 0], sizes = [2, 1, 128], strides = [1, 1, 1]} : vector<2x8x128xf32> to vector<2x1x128xf32>
    %47 = vector.shape_cast %46 : vector<2x1x128xf32> to vector<2x128xf32>
    %48 = vector.extract_strided_slice %16 {offsets = [0, 3, 0], sizes = [2, 1, 128], strides = [1, 1, 1]} : vector<2x8x128xf32> to vector<2x1x128xf32>
    %49 = vector.shape_cast %48 : vector<2x1x128xf32> to vector<2x128xf32>
    %50 = arith.addf %47, %49 : vector<2x128xf32>
    %51 = vector.extract_strided_slice %16 {offsets = [0, 4, 0], sizes = [2, 1, 128], strides = [1, 1, 1]} : vector<2x8x128xf32> to vector<2x1x128xf32>
    %52 = vector.shape_cast %51 : vector<2x1x128xf32> to vector<2x128xf32>
    %53 = arith.addf %50, %52 : vector<2x128xf32>
    %54 = vector.extract_strided_slice %16 {offsets = [0, 5, 0], sizes = [2, 1, 128], strides = [1, 1, 1]} : vector<2x8x128xf32> to vector<2x1x128xf32>
    %55 = vector.shape_cast %54 : vector<2x1x128xf32> to vector<2x128xf32>
    %56 = arith.addf %53, %55 : vector<2x128xf32>
    %57 = vector.extract_strided_slice %16 {offsets = [0, 6, 0], sizes = [2, 1, 128], strides = [1, 1, 1]} : vector<2x8x128xf32> to vector<2x1x128xf32>
    %58 = vector.shape_cast %57 : vector<2x1x128xf32> to vector<2x128xf32>
    %59 = arith.addf %56, %58 : vector<2x128xf32>
    %60 = vector.shape_cast %59 : vector<2x128xf32> to vector<2x1x128xf32>
    %61 = vector.extract_strided_slice %30 {offsets = [0, 0, 0], sizes = [2, 1, 128], strides = [1, 1, 1]} : vector<2x8x128xf32> to vector<2x1x128xf32>
    %62 = vector.shape_cast %61 : vector<2x1x128xf32> to vector<2x128xf32>
    %63 = vector.extract_strided_slice %30 {offsets = [0, 1, 0], sizes = [2, 1, 128], strides = [1, 1, 1]} : vector<2x8x128xf32> to vector<2x1x128xf32>
    %64 = vector.shape_cast %63 : vector<2x1x128xf32> to vector<2x128xf32>
    %65 = arith.addf %62, %64 : vector<2x128xf32>
    %66 = vector.extract_strided_slice %30 {offsets = [0, 2, 0], sizes = [2, 1, 128], strides = [1, 1, 1]} : vector<2x8x128xf32> to vector<2x1x128xf32>
    %67 = vector.shape_cast %66 : vector<2x1x128xf32> to vector<2x128xf32>
    %68 = arith.addf %65, %67 : vector<2x128xf32>
    %69 = vector.extract_strided_slice %30 {offsets = [0, 3, 0], sizes = [2, 1, 128], strides = [1, 1, 1]} : vector<2x8x128xf32> to vector<2x1x128xf32>
    %70 = vector.shape_cast %69 : vector<2x1x128xf32> to vector<2x128xf32>
    %71 = arith.addf %68, %70 : vector<2x128xf32>
    %72 = vector.extract_strided_slice %30 {offsets = [0, 4, 0], sizes = [2, 1, 128], strides = [1, 1, 1]} : vector<2x8x128xf32> to vector<2x1x128xf32>
    %73 = vector.shape_cast %72 : vector<2x1x128xf32> to vector<2x128xf32>
    %74 = arith.addf %71, %73 : vector<2x128xf32>
    %75 = vector.shape_cast %74 : vector<2x128xf32> to vector<2x1x128xf32>
    %76 = vector.extract_strided_slice %30 {offsets = [0, 2, 0], sizes = [2, 1, 128], strides = [1, 1, 1]} : vector<2x8x128xf32> to vector<2x1x128xf32>
    %77 = vector.shape_cast %76 : vector<2x1x128xf32> to vector<2x128xf32>
    %78 = vector.extract_strided_slice %30 {offsets = [0, 3, 0], sizes = [2, 1, 128], strides = [1, 1, 1]} : vector<2x8x128xf32> to vector<2x1x128xf32>
    %79 = vector.shape_cast %78 : vector<2x1x128xf32> to vector<2x128xf32>
    %80 = arith.addf %77, %79 : vector<2x128xf32>
    %81 = vector.extract_strided_slice %30 {offsets = [0, 4, 0], sizes = [2, 1, 128], strides = [1, 1, 1]} : vector<2x8x128xf32> to vector<2x1x128xf32>
    %82 = vector.shape_cast %81 : vector<2x1x128xf32> to vector<2x128xf32>
    %83 = arith.addf %80, %82 : vector<2x128xf32>
    %84 = vector.extract_strided_slice %30 {offsets = [0, 5, 0], sizes = [2, 1, 128], strides = [1, 1, 1]} : vector<2x8x128xf32> to vector<2x1x128xf32>
    %85 = vector.shape_cast %84 : vector<2x1x128xf32> to vector<2x128xf32>
    %86 = arith.addf %83, %85 : vector<2x128xf32>
    %87 = vector.extract_strided_slice %30 {offsets = [0, 6, 0], sizes = [2, 1, 128], strides = [1, 1, 1]} : vector<2x8x128xf32> to vector<2x1x128xf32>
    %88 = vector.shape_cast %87 : vector<2x1x128xf32> to vector<2x128xf32>
    %89 = arith.addf %86, %88 : vector<2x128xf32>
    %90 = vector.shape_cast %89 : vector<2x128xf32> to vector<2x1x128xf32>
    %91 = tpu.concatenate %45, %60, %75, %90 in 1 : vector<2x1x128xf32>, vector<2x1x128xf32>, vector<2x1x128xf32>, vector<2x1x128xf32> -> vector<2x4x128xf32>
    %92 = vector.shape_cast %91 : vector<2x4x128xf32> to vector<8x128xf32>
    %c0_3 = arith.constant 0 : index
    %c0_4 = arith.constant 0 : index
    %93 = vector.load %arg2[%c0_3, %c0_4] : memref<128x128xf32, #tpu.memory_space<vmem>>, vector<128x128xf32>
    %cst_5 = arith.constant dense<0.000000e+00> : vector<8x128xf32>
    %94 = tpu.matmul %92, %93, %cst_5 {dimension_numbers = #tpu.dot_dimension_numbers<[1], [0], [0], [1], [0, 0, 1, 1], [], []>} : vector<8x128xf32>, vector<128x128xf32>, vector<8x128xf32> -> vector<8x128xf32>
    %cst_6 = arith.constant dense<0.000000e+00> : vector<128xf32>
    %95 = vector.multi_reduction <add>, %94, %cst_6 [0] : vector<8x128xf32> to vector<128xf32>
    %96 = vector.shape_cast %95 : vector<128xf32> to vector<1x128xf32>
    %cst_7 = arith.constant 8.000000e+00 : f32
    %97 = vector.broadcast %cst_7 : f32 to vector<1x128xf32>
    %98 = arith.divf %96, %97 : vector<1x128xf32>
    %99 = vector.broadcast %98 : vector<1x128xf32> to vector<8x128xf32>
    %100 = arith.subf %94, %99 : vector<8x128xf32>
    %101 = arith.mulf %100, %100 : vector<8x128xf32>
    %cst_8 = arith.constant dense<0.000000e+00> : vector<128xf32>
    %102 = vector.multi_reduction <add>, %101, %cst_8 [0] : vector<8x128xf32> to vector<128xf32>
    %103 = vector.shape_cast %102 : vector<128xf32> to vector<1x128xf32>
    %cst_9 = arith.constant 8.000000e+00 : f32
    %104 = vector.broadcast %cst_9 : f32 to vector<1x128xf32>
    %105 = arith.divf %103, %104 : vector<1x128xf32>
    %cst_10 = arith.constant 9.99999974E-6 : f32
    %106 = vector.broadcast %cst_10 : f32 to vector<1x128xf32>
    %107 = arith.addf %105, %106 : vector<1x128xf32>
    %108 = math.rsqrt %107 : vector<1x128xf32>
    %109 = vector.broadcast %108 : vector<1x128xf32> to vector<8x128xf32>
    %110 = arith.mulf %100, %109 : vector<8x128xf32>
    %c0_11 = arith.constant 0 : index
    %c0_12 = arith.constant 0 : index
    %111 = vector.load %arg3[%c0_11, %c0_12] : memref<1x128xf32, #tpu.memory_space<vmem>>, vector<1x128xf32>
    %112 = vector.broadcast %111 : vector<1x128xf32> to vector<8x128xf32>
    %113 = arith.mulf %110, %112 : vector<8x128xf32>
    %c0_13 = arith.constant 0 : index
    %c0_14 = arith.constant 0 : index
    %114 = vector.load %arg4[%c0_13, %c0_14] : memref<1x128xf32, #tpu.memory_space<vmem>>, vector<1x128xf32>
    %115 = vector.broadcast %114 : vector<1x128xf32> to vector<8x128xf32>
    %116 = arith.addf %113, %115 : vector<8x128xf32>
    %cst_15 = arith.constant 0.000000e+00 : f32
    %117 = vector.broadcast %cst_15 : f32 to vector<8x128xf32>
    %118 = arith.maximumf %116, %117 : vector<8x128xf32>
    %119 = vector.shape_cast %118 : vector<8x128xf32> to vector<2x4x128xf32>
    %120 = vector.extract_strided_slice %119 {offsets = [0, 0, 0], sizes = [2, 1, 128], strides = [1, 1, 1]} : vector<2x4x128xf32> to vector<2x1x128xf32>
    %121 = vector.shape_cast %120 : vector<2x1x128xf32> to vector<2x128xf32>
    %122 = vector.extract_strided_slice %119 {offsets = [0, 1, 0], sizes = [2, 1, 128], strides = [1, 1, 1]} : vector<2x4x128xf32> to vector<2x1x128xf32>
    %123 = vector.shape_cast %122 : vector<2x1x128xf32> to vector<2x128xf32>
    %124 = vector.extract_strided_slice %119 {offsets = [0, 2, 0], sizes = [2, 1, 128], strides = [1, 1, 1]} : vector<2x4x128xf32> to vector<2x1x128xf32>
    %125 = vector.shape_cast %124 : vector<2x1x128xf32> to vector<2x128xf32>
    %126 = vector.extract_strided_slice %119 {offsets = [0, 3, 0], sizes = [2, 1, 128], strides = [1, 1, 1]} : vector<2x4x128xf32> to vector<2x1x128xf32>
    %127 = vector.shape_cast %126 : vector<2x1x128xf32> to vector<2x128xf32>
    %128 = tpu.concatenate %121, %123, %125, %127 in 1 : vector<2x128xf32>, vector<2x128xf32>, vector<2x128xf32>, vector<2x128xf32> -> vector<2x512xf32>
    %c0_16 = arith.constant 0 : index
    %c0_17 = arith.constant 0 : index
    %129 = vector.load %arg5[%c0_16, %c0_17] : memref<512x768xf32, #tpu.memory_space<vmem>>, vector<512x768xf32>
    %cst_18 = arith.constant dense<0.000000e+00> : vector<2x768xf32>
    %130 = tpu.matmul %128, %129, %cst_18 {dimension_numbers = #tpu.dot_dimension_numbers<[1], [0], [0], [1], [0, 0, 1, 1], [], []>} : vector<2x512xf32>, vector<512x768xf32>, vector<2x768xf32> -> vector<2x768xf32>
    %cst_19 = arith.constant dense<0.000000e+00> : vector<768xf32>
    %131 = vector.multi_reduction <add>, %130, %cst_19 [0] : vector<2x768xf32> to vector<768xf32>
    %132 = vector.shape_cast %131 : vector<768xf32> to vector<1x768xf32>
    %cst_20 = arith.constant 2.000000e+00 : f32
    %133 = vector.broadcast %cst_20 : f32 to vector<1x768xf32>
    %134 = arith.divf %132, %133 : vector<1x768xf32>
    %135 = vector.broadcast %134 : vector<1x768xf32> to vector<2x768xf32>
    %136 = arith.subf %130, %135 : vector<2x768xf32>
    %137 = arith.mulf %136, %136 : vector<2x768xf32>
    %cst_21 = arith.constant dense<0.000000e+00> : vector<768xf32>
    %138 = vector.multi_reduction <add>, %137, %cst_21 [0] : vector<2x768xf32> to vector<768xf32>
    %139 = vector.shape_cast %138 : vector<768xf32> to vector<1x768xf32>
    %cst_22 = arith.constant 2.000000e+00 : f32
    %140 = vector.broadcast %cst_22 : f32 to vector<1x768xf32>
    %141 = arith.divf %139, %140 : vector<1x768xf32>
    %cst_23 = arith.constant 9.99999974E-6 : f32
    %142 = vector.broadcast %cst_23 : f32 to vector<1x768xf32>
    %143 = arith.addf %141, %142 : vector<1x768xf32>
    %144 = math.rsqrt %143 : vector<1x768xf32>
    %145 = vector.broadcast %144 : vector<1x768xf32> to vector<2x768xf32>
    %146 = arith.mulf %136, %145 : vector<2x768xf32>
    %c0_24 = arith.constant 0 : index
    %c0_25 = arith.constant 0 : index
    %147 = vector.load %arg6[%c0_24, %c0_25] : memref<1x768xf32, #tpu.memory_space<vmem>>, vector<1x768xf32>
    %148 = vector.broadcast %147 : vector<1x768xf32> to vector<2x768xf32>
    %149 = arith.mulf %146, %148 : vector<2x768xf32>
    %c0_26 = arith.constant 0 : index
    %c0_27 = arith.constant 0 : index
    %150 = vector.load %arg7[%c0_26, %c0_27] : memref<1x768xf32, #tpu.memory_space<vmem>>, vector<1x768xf32>
    %151 = vector.broadcast %150 : vector<1x768xf32> to vector<2x768xf32>
    %152 = arith.addf %149, %151 : vector<2x768xf32>
    %cst_28 = arith.constant 0.000000e+00 : f32
    %153 = vector.broadcast %cst_28 : f32 to vector<2x768xf32>
    %154 = arith.maximumf %152, %153 : vector<2x768xf32>
    %c0_29 = arith.constant 0 : index
    %c0_30 = arith.constant 0 : index
    %155 = vector.load %arg8[%c0_29, %c0_30] : memref<768x128xf32, #tpu.memory_space<vmem>>, vector<768x128xf32>
    %cst_31 = arith.constant dense<0.000000e+00> : vector<2x128xf32>
    %156 = tpu.matmul %154, %155, %cst_31 {dimension_numbers = #tpu.dot_dimension_numbers<[1], [0], [0], [1], [0, 0, 1, 1], [], []>} : vector<2x768xf32>, vector<768x128xf32>, vector<2x128xf32> -> vector<2x128xf32>
    %c0_32 = arith.constant 0 : index
    %c0_33 = arith.constant 0 : index
    %157 = vector.load %arg9[%c0_32, %c0_33] : memref<1x128xf32, #tpu.memory_space<vmem>>, vector<1x128xf32>
    %158 = vector.broadcast %157 : vector<1x128xf32> to vector<2x128xf32>
    %159 = arith.addf %156, %158 : vector<2x128xf32>
    %c0_34 = arith.constant 0 : index
    %c0_35 = arith.constant 0 : index
    %160 = vector.load %arg10[%c0_34, %c0_35] : memref<2x128xf32, #tpu.memory_space<vmem>>, vector<2x128xf32>
    tpu.vector_store %arg10[%c0_34, %c0_35], %159 {strides = array<i32>} : memref<2x128xf32, #tpu.memory_space<vmem>>, vector<2x128xf32>,
    return
  }
  func.func @transform_0(%arg0: i32) -> (i32, i32, i32, i32) {
    %c0_i32 = arith.constant 0 : i32
    %c0_i32_0 = arith.constant 0 : i32
    %c0_i32_1 = arith.constant 0 : i32
    %c0_i32_2 = arith.constant 0 : i32
    %c0_i32_3 = arith.constant 0 : i32
    return %c0_i32, %c0_i32_0, %c0_i32_1, %c0_i32_2 : i32, i32, i32, i32
  }
  func.func @transform_1(%arg0: i32) -> (i32, i32) {
    %c0_i32 = arith.constant 0 : i32
    %c0_i32_0 = arith.constant 0 : i32
    %c0_i32_1 = arith.constant 0 : i32
    return %c0_i32, %c0_i32_0 : i32, i32
  }
  func.func @transform_2(%arg0: i32) -> (i32, i32) {
    %c0_i32 = arith.constant 0 : i32
    %c0_i32_0 = arith.constant 0 : i32
    %c0_i32_1 = arith.constant 0 : i32
    return %c0_i32, %c0_i32_0 : i32, i32
  }
  func.func @transform_3(%arg0: i32) -> (i32, i32) {
    %c0_i32 = arith.constant 0 : i32
    %c0_i32_0 = arith.constant 0 : i32
    %c0_i32_1 = arith.constant 0 : i32
    return %c0_i32, %c0_i32_0 : i32, i32
  }
  func.func @transform_4(%arg0: i32) -> (i32, i32) {
    %c0_i32 = arith.constant 0 : i32
    %c0_i32_0 = arith.constant 0 : i32
    %c0_i32_1 = arith.constant 0 : i32
    return %c0_i32, %c0_i32_0 : i32, i32
  }
  func.func @transform_5(%arg0: i32) -> (i32, i32) {
    %c0_i32 = arith.constant 0 : i32
    %c0_i32_0 = arith.constant 0 : i32
    %c0_i32_1 = arith.constant 0 : i32
    return %c0_i32, %c0_i32_0 : i32, i32
  }
  func.func @transform_6(%arg0: i32) -> (i32, i32) {
    %c0_i32 = arith.constant 0 : i32
    %c0_i32_0 = arith.constant 0 : i32
    %c0_i32_1 = arith.constant 0 : i32
    return %c0_i32, %c0_i32_0 : i32, i32
  }
  func.func @transform_7(%arg0: i32) -> (i32, i32) {
    %c0_i32 = arith.constant 0 : i32
    %c0_i32_0 = arith.constant 0 : i32
    %c0_i32_1 = arith.constant 0 : i32
    return %c0_i32, %c0_i32_0 : i32, i32
  }
  func.func @transform_8(%arg0: i32) -> (i32, i32) {
    %c0_i32 = arith.constant 0 : i32
    %c0_i32_0 = arith.constant 0 : i32
    %c0_i32_1 = arith.constant 0 : i32
    return %c0_i32, %c0_i32_0 : i32, i32
  }
  func.func @transform_9(%arg0: i32) -> (i32, i32) {
    %c0_i32 = arith.constant 0 : i32
    %c0_i32_0 = arith.constant 0 : i32
    %c0_i32_1 = arith.constant 0 : i32
    return %c0_i32, %c0_i32_0 : i32, i32
  }
}

</mosaic_0001>

<llo_original>
// kernel: aux_head_imagenet_forward.1
$region0: #{aux_head_imagenet_forward.1}
  #allocation0 [shape = 'u32[]', space=smem, size = 0x4, offset = 0x4, fixed_abs, tag = 'smem constant byte address 0x4 - core index']
  #allocation1 [shape = 'u32[144,128]{1,0:T(1,128)}', space=vmem, size = 0x12000, scoped, tag = 'internal scratch']
  %s0 = inlined_call_operand.hbm [shape: f32[2,8,8,128], index: 0, kind: input, shape index: {}]
  %s1 = inlined_call_operand.hbm [shape: f32[128,128], index: 1, kind: input, shape index: {}]
  %s2 = inlined_call_operand.hbm [shape: f32[1,128], index: 2, kind: input, shape index: {}]
  %s3 = inlined_call_operand.hbm [shape: f32[1,128], index: 3, kind: input, shape index: {}]
  %s4 = inlined_call_operand.hbm [shape: f32[512,768], index: 4, kind: input, shape index: {}]
  %s5 = inlined_call_operand.hbm [shape: f32[1,768], index: 5, kind: input, shape index: {}]
  %s6 = inlined_call_operand.hbm [shape: f32[1,768], index: 6, kind: input, shape index: {}]
  %s7 = inlined_call_operand.hbm [shape: f32[768,128], index: 7, kind: input, shape index: {}]
  %s8 = inlined_call_operand.hbm [shape: f32[1,128], index: 8, kind: input, shape index: {}]
  %s9 = inlined_call_operand.hbm [shape: f32[2,128], index: 9, kind: output, shape index: {}]
  %s10 = sld [smem:[#allocation0]]
  $region82: #{aux_head_imagenet_forward.1} parent=0
    _
  %s12 = ssub.s32 1, %s10
  %s13 = scalar_select 0, %s12, %s10
  $region1: #{aux_head_imagenet_forward.1} parent=0
    #allocation2 [shape = 'u8[65536]{0}', space=vmem, size = 0x10000, scoped, tag = 'input window, operand 0, single buffered']
    #allocation3 [shape = 's32[1]{0}', space=sflag, size = 0x4, scoped, tag = 'scoped memory for aux_head_imagenet_forward.1']
    #allocation4 [shape = 's32[1]{0}', space=sflag, size = 0x4, scoped, tag = 'scoped memory for aux_head_imagenet_forward.1']
    #allocation5 [shape = 'u8[65536]{0}', space=vmem, size = 0x10000, scoped, tag = 'input window, operand 1, single buffered']
    #allocation6 [shape = 's32[1]{0}', space=sflag, size = 0x4, scoped, tag = 'scoped memory for aux_head_imagenet_forward.1']
    #allocation7 [shape = 'u8[512]{0}', space=vmem, size = 0x400, scoped, tag = 'input window, operand 2, single buffered']
    #allocation8 [shape = 'u8[512]{0}', space=vmem, size = 0x400, scoped, tag = 'input window, operand 3, single buffered']
    #allocation9 [shape = 's32[1]{0}', space=sflag, size = 0x4, scoped, tag = 'scoped memory for aux_head_imagenet_forward.1']
    #allocation10 [shape = 'u8[1572864]{0}', space=vmem, size = 0x180000, scoped, tag = 'input window, operand 4, single buffered']
    #allocation11 [shape = 'u8[3072]{0}', space=vmem, size = 0xc00, scoped, tag = 'input window, operand 5, single buffered']
    #allocation12 [shape = 's32[1]{0}', space=sflag, size = 0x4, scoped, tag = 'scoped memory for aux_head_imagenet_forward.1']
    #allocation13 [shape = 'u8[3072]{0}', space=vmem, size = 0xc00, scoped, tag = 'input window, operand 6, single buffered']
    #allocation14 [shape = 'u8[393216]{0}', space=vmem, size = 0x60000, scoped, tag = 'input window, operand 7, single buffered']
    #allocation15 [shape = 's32[1]{0}', space=sflag, size = 0x4, scoped, tag = 'scoped memory for aux_head_imagenet_forward.1']
    #allocation16 [shape = 'u8[512]{0}', space=vmem, size = 0x400, scoped, tag = 'input window, operand 8, single buffered']
    #allocation17 [shape = 'u8[1024]{0}', space=vmem, size = 0x400, scoped, tag = 'output window, operand 0, single buffered']
    %14 = vsyncpa [#allocation3], 0
    %15 = vsyncpa [#allocation6], 0
    %16 = vsyncpa [#allocation9], 0
    %17 = vsyncpa [#allocation12], 0
    %18 = vsyncpa [#allocation15], 0
    %19 = vsyncpa [#allocation4], 0
    // Predicated region
    $region2: #{aux_head_imagenet_forward.1} parent=1 // pred_check
      _
    $region3: #{aux_head_imagenet_forward.1} parent=1 // pred_check_branch
      %21 = sbr.rel (0) target = $region5
    $region4: #{aux_head_imagenet_forward.1} parent=1 // pred_region
      %s23 = ssub.s32 2048, 2048
      %24 = vsyncadd [#allocation3], %s23
      %s25 = sshll.u32 [#allocation2], 4
      %s26 = int_to_ptr.vmem [resolvable:$true] %s25
      %31 = dma.hbm_to_vmem [thread:$0]  %s0, 2048, %s26, [#allocation3], 128, 128, 8
    $region5: #{aux_head_imagenet_forward.1} parent=1 // pred_fallthru
      _
    // Predicated region
    $region6: #{aux_head_imagenet_forward.1} parent=1 // pred_check
      _
    $region7: #{aux_head_imagenet_forward.1} parent=1 // pred_check_branch
      %33 = sbr.rel (0) target = $region9
    $region8: #{aux_head_imagenet_forward.1} parent=1 // pred_region
      %s35 = ssub.s32 2048, 2048
      %36 = vsyncadd [#allocation6], %s35
      %s37 = sshll.u32 [#allocation5], 4
      %s38 = int_to_ptr.vmem [resolvable:$true] %s37
      %43 = dma.hbm_to_vmem [thread:$0]  %s1, 2048, %s38, [#allocation6], 128, 128, 8
    $region9: #{aux_head_imagenet_forward.1} parent=1 // pred_fallthru
      _
    // Predicated region
    $region10: #{aux_head_imagenet_forward.1} parent=1 // pred_check
      _
    $region11: #{aux_head_imagenet_forward.1} parent=1 // pred_check_branch
      %45 = sbr.rel (0) target = $region13
    $region12: #{aux_head_imagenet_forward.1} parent=1 // pred_region
      %s47 = ssub.s32 16, 16
      %48 = vsyncadd [#allocation6], %s47
      %s50 = sshll.u32 [#allocation7], 4
      %s51 = int_to_ptr.vmem [resolvable:$true] %s50
      %53 = dma.hbm_to_vmem [thread:$0]  %s2, 16, %s51, [#allocation6]
    $region13: #{aux_head_imagenet_forward.1} parent=1 // pred_fallthru
      _
    // Predicated region
    $region14: #{aux_head_imagenet_forward.1} parent=1 // pred_check
      _
    $region15: #{aux_head_imagenet_forward.1} parent=1 // pred_check_branch
      %55 = sbr.rel (0) target = $region17
    $region16: #{aux_head_imagenet_forward.1} parent=1 // pred_region
      %s57 = ssub.s32 16, 16
      %58 = vsyncadd [#allocation9], %s57
      %s60 = sshll.u32 [#allocation8], 4
      %s61 = int_to_ptr.vmem [resolvable:$true] %s60
      %63 = dma.hbm_to_vmem [thread:$0]  %s3, 16, %s61, [#allocation9]
    $region17: #{aux_head_imagenet_forward.1} parent=1 // pred_fallthru
      _
    // Predicated region
    $region18: #{aux_head_imagenet_forward.1} parent=1 // pred_check
      _
    $region19: #{aux_head_imagenet_forward.1} parent=1 // pred_check_branch
      %65 = sbr.rel (0) target = $region21
    $region20: #{aux_head_imagenet_forward.1} parent=1 // pred_region
      %s67 = ssub.s32 49152, 49152
      %68 = vsyncadd [#allocation9], %s67
      %s69 = sshll.u32 [#allocation10], 4
      %s70 = int_to_ptr.vmem [resolvable:$true] %s69
      %75 = dma.hbm_to_vmem [thread:$0]  %s4, 49152, %s70, [#allocation9], 768, 768, 48
    $region21: #{aux_head_imagenet_forward.1} parent=1 // pred_fallthru
      _
    // Predicated region
    $region22: #{aux_head_imagenet_forward.1} parent=1 // pred_check
      _
    $region23: #{aux_head_imagenet_forward.1} parent=1 // pred_check_branch
      %77 = sbr.rel (0) target = $region25
    $region24: #{aux_head_imagenet_forward.1} parent=1 // pred_region
      %s79 = ssub.s32 96, 96
      %80 = vsyncadd [#allocation12], %s79
      %s82 = sshll.u32 [#allocation11], 4
      %s83 = int_to_ptr.vmem [resolvable:$true] %s82
      %85 = dma.hbm_to_vmem [thread:$0]  %s5, 96, %s83, [#allocation12]
    $region25: #{aux_head_imagenet_forward.1} parent=1 // pred_fallthru
      _
    // Predicated region
    $region26: #{aux_head_imagenet_forward.1} parent=1 // pred_check
      _
    $region27: #{aux_head_imagenet_forward.1} parent=1 // pred_check_branch
      %87 = sbr.rel (0) target = $region29
    $region28: #{aux_head_imagenet_forward.1} parent=1 // pred_region
      %s89 = ssub.s32 96, 96
      %90 = vsyncadd [#allocation12], %s89
      %s92 = sshll.u32 [#allocation13], 4
      %s93 = int_to_ptr.vmem [resolvable:$true] %s92
      %95 = dma.hbm_to_vmem [thread:$0]  %s6, 96, %s93, [#allocation12]
    $region29: #{aux_head_imagenet_forward.1} parent=1 // pred_fallthru
      _
    // Predicated region
    $region30: #{aux_head_imagenet_forward.1} parent=1 // pred_check
      _
    $region31: #{aux_head_imagenet_forward.1} parent=1 // pred_check_branch
      %97 = sbr.rel (0) target = $region33
    $region32: #{aux_head_imagenet_forward.1} parent=1 // pred_region
      %s99 = ssub.s32 12288, 12288
      %100 = vsyncadd [#allocation15], %s99
      %s101 = sshll.u32 [#allocation14], 4
      %s102 = int_to_ptr.vmem [resolvable:$true] %s101
      %107 = dma.hbm_to_vmem [thread:$0]  %s7, 12288, %s102, [#allocation15], 128, 128, 8
    $region33: #{aux_head_imagenet_forward.1} parent=1 // pred_fallthru
      _
    // Predicated region
    $region34: #{aux_head_imagenet_forward.1} parent=1 // pred_check
      _
    $region35: #{aux_head_imagenet_forward.1} parent=1 // pred_check_branch
      %109 = sbr.rel (0) target = $region37
    $region36: #{aux_head_imagenet_forward.1} parent=1 // pred_region
      %s111 = ssub.s32 16, 16
      %112 = vsyncadd [#allocation15], %s111
      %s114 = sshll.u32 [#allocation16], 4
      %s115 = int_to_ptr.vmem [resolvable:$true] %s114
      %117 = dma.hbm_to_vmem [thread:$0]  %s8, 16, %s115, [#allocation15]
    $region37: #{aux_head_imagenet_forward.1} parent=1 // pred_fallthru
      _
    // Predicated region
    $region38: #{aux_head_imagenet_forward.1} parent=1 // pred_check
      _
    $region39: #{aux_head_imagenet_forward.1} parent=1 // pred_check_branch
      %119 = sbr.rel (0) target = $region41
    $region40: #{aux_head_imagenet_forward.1} parent=1 // pred_region
      %120 = dma.done [#allocation3], 2048
    $region41: #{aux_head_imagenet_forward.1} parent=1 // pred_fallthru
      _
    // Predicated region
    $region42: #{aux_head_imagenet_forward.1} parent=1 // pred_check
      _
    $region43: #{aux_head_imagenet_forward.1} parent=1 // pred_check_branch
      %122 = sbr.rel (0) target = $region45
    $region44: #{aux_head_imagenet_forward.1} parent=1 // pred_region
      %123 = dma.done [#allocation6], 2048
    $region45: #{aux_head_imagenet_forward.1} parent=1 // pred_fallthru
      _
    // Predicated region
    $region46: #{aux_head_imagenet_forward.1} parent=1 // pred_check
      _
    $region47: #{aux_head_imagenet_forward.1} parent=1 // pred_check_branch
      %125 = sbr.rel (0) target = $region49
    $region48: #{aux_head_imagenet_forward.1} parent=1 // pred_region
      %126 = dma.done [#allocation6], 16
    $region49: #{aux_head_imagenet_forward.1} parent=1 // pred_fallthru
      _
    // Predicated region
    $region50: #{aux_head_imagenet_forward.1} parent=1 // pred_check
      _
    $region51: #{aux_head_imagenet_forward.1} parent=1 // pred_check_branch
      %128 = sbr.rel (0) target = $region53
    $region52: #{aux_head_imagenet_forward.1} parent=1 // pred_region
      %129 = dma.done [#allocation9], 16
    $region53: #{aux_head_imagenet_forward.1} parent=1 // pred_fallthru
      _
    // Predicated region
    $region54: #{aux_head_imagenet_forward.1} parent=1 // pred_check
      _
    $region55: #{aux_head_imagenet_forward.1} parent=1 // pred_check_branch
      %131 = sbr.rel (0) target = $region57
    $region56: #{aux_head_imagenet_forward.1} parent=1 // pred_region
      %132 = dma.done [#allocation9], 49152
    $region57: #{aux_head_imagenet_forward.1} parent=1 // pred_fallthru
      _
    // Predicated region
    $region58: #{aux_head_imagenet_forward.1} parent=1 // pred_check
      _
    $region59: #{aux_head_imagenet_forward.1} parent=1 // pred_check_branch
      %134 = sbr.rel (0) target = $region61
    $region60: #{aux_head_imagenet_forward.1} parent=1 // pred_region
      %135 = dma.done [#allocation12], 96
    $region61: #{aux_head_imagenet_forward.1} parent=1 // pred_fallthru
      _
    // Predicated region
    $region62: #{aux_head_imagenet_forward.1} parent=1 // pred_check
      _
    $region63: #{aux_head_imagenet_forward.1} parent=1 // pred_check_branch
      %137 = sbr.rel (0) target = $region65
    $region64: #{aux_head_imagenet_forward.1} parent=1 // pred_region
      %138 = dma.done [#allocation12], 96
    $region65: #{aux_head_imagenet_forward.1} parent=1 // pred_fallthru
      _
    // Predicated region
    $region66: #{aux_head_imagenet_forward.1} parent=1 // pred_check
      _
    $region67: #{aux_head_imagenet_forward.1} parent=1 // pred_check_branch
      %140 = sbr.rel (0) target = $region69
    $region68: #{aux_head_imagenet_forward.1} parent=1 // pred_region
      %141 = dma.done [#allocation15], 12288
    $region69: #{aux_head_imagenet_forward.1} parent=1 // pred_fallthru
      _
    // Predicated region
    $region70: #{aux_head_imagenet_forward.1} parent=1 // pred_check
      _
    $region71: #{aux_head_imagenet_forward.1} parent=1 // pred_check_branch
      %143 = sbr.rel (0) target = $region73
    $region72: #{aux_head_imagenet_forward.1} parent=1 // pred_region
      %144 = dma.done [#allocation15], 16
    $region73: #{aux_head_imagenet_forward.1} parent=1 // pred_fallthru
      _
    %v145 = vld [vmem:[#allocation2] sm:$0xff]
    %v146 = vld [vmem:[#allocation2 + $0x8] sm:$0xff]
    %v147 = vld [vmem:[#allocation2 + $0x10] sm:$0xff]
    %v148 = vld [vmem:[#allocation2 + $0x18] sm:$0xff]
    %v149 = vld [vmem:[#allocation2 + $0x20] sm:$0xff]
    %v150 = vld [vmem:[#allocation2 + $0x28] sm:$0xff]
    %v151 = vld [vmem:[#allocation2 + $0x30] sm:$0xff]
    %v152 = vld [vmem:[#allocation2 + $0x40] sm:$0xff]
    %v153 = vld [vmem:[#allocation2 + $0x48] sm:$0xff]
    %v154 = vld [vmem:[#allocation2 + $0x50] sm:$0xff]
    %v155 = vld [vmem:[#allocation2 + $0x58] sm:$0xff]
    %v156 = vld [vmem:[#allocation2 + $0x60] sm:$0xff]
    %v157 = vld [vmem:[#allocation2 + $0x68] sm:$0xff]
    %v158 = vld [vmem:[#allocation2 + $0x70] sm:$0xff]
    %v159 = vmax.f32 %v145, 0.0
    %v160 = vmax.f32 %v146, 0.0
    %v161 = vmax.f32 %v147, 0.0
    %v162 = vmax.f32 %v148, 0.0
    %v163 = vmax.f32 %v149, 0.0
    %v164 = vmax.f32 %v150, 0.0
    %v165 = vmax.f32 %v151, 0.0
    %v166 = vmax.f32 %v152, 0.0
    %v167 = vmax.f32 %v153, 0.0
    %v168 = vmax.f32 %v154, 0.0
    %v169 = vmax.f32 %v155, 0.0
    %v170 = vmax.f32 %v156, 0.0
    %v171 = vmax.f32 %v157, 0.0
    %v172 = vmax.f32 %v158, 0.0
    %v173 = vadd.f32 %v159, %v160
    %v174 = vadd.f32 %v166, %v167
    %v175 = vadd.f32 %v173, %v161
    %v176 = vadd.f32 %v174, %v168
    %v177 = vadd.f32 %v175, %v162
    %v178 = vadd.f32 %v176, %v169
    %v179 = vadd.f32 %v177, %v163
    %v180 = vadd.f32 %v178, %v170
    %v181 = vadd.f32 %v161, %v162
    %v182 = vadd.f32 %v168, %v169
    %v183 = vadd.f32 %v181, %v163
    %v184 = vadd.f32 %v182, %v170
    %v185 = vadd.f32 %v183, %v164
    %v186 = vadd.f32 %v184, %v171
    %v187 = vadd.f32 %v185, %v165
    %v188 = vadd.f32 %v186, %v172
    %v191 = vrot.slane %v179, 1
    %v192 = vrot.slane %v180, 1
    %v195 = vadd.f32 %v179, %v191
    %v196 = vadd.f32 %v180, %v192
    %v197 = vrot.slane %v179, 2
    %v198 = vrot.slane %v180, 2
    %v201 = vadd.f32 %v195, %v197
    %v202 = vadd.f32 %v196, %v198
    %v203 = vrot.slane %v179, 3
    %v204 = vrot.slane %v180, 3
    %v207 = vadd.f32 %v201, %v203
    %v208 = vadd.f32 %v202, %v204
    %v209 = vrot.slane %v179, 4
    %v210 = vrot.slane %v180, 4
    %v213 = vadd.f32 %v207, %v209
    %v214 = vadd.f32 %v208, %v210
    %v217 = vrot.slane %v187, 1
    %v218 = vrot.slane %v188, 1
    %v221 = vadd.f32 %v187, %v217
    %v222 = vadd.f32 %v188, %v218
    %v223 = vrot.slane %v187, 2
    %v224 = vrot.slane %v188, 2
    %v227 = vadd.f32 %v221, %v223
    %v228 = vadd.f32 %v222, %v224
    %v229 = vrot.slane %v187, 3
    %v230 = vrot.slane %v188, 3
    %v233 = vadd.f32 %v227, %v229
    %v234 = vadd.f32 %v228, %v230
    %v235 = vrot.slane %v187, 4
    %v236 = vrot.slane %v188, 4
    %v239 = vadd.f32 %v233, %v235
    %v240 = vadd.f32 %v234, %v236
    %v243 = vrot.slane %v213, 1
    %v244 = vrot.slane %v214, 1
    %v249 = vrot.slane %v239, 6
    %v250 = vrot.slane %v240, 6
    %v253 = vrot.slane %v239, 7
    %v254 = vrot.slane %v240, 7
    %vm257 = vcmask 1040384
    %v258 = vsel %vm257, %v213, %v243
    %v259 = vsel %vm257, %v214, %v244
    %vm260 = vcmask 1041408
    %v261 = vsel %vm260, %v258, %v249
    %v262 = vsel %vm260, %v259, %v250
    %vm263 = vcmask 1042432
    %v264 = vsel %vm263, %v261, %v253
    %v265 = vsel %vm263, %v262, %v254
    %v266 = vld [vmem:[#allocation5] sm:$0xff]
    %v267 = vld [vmem:[#allocation5 + $0x8] sm:$0xff]
    %v268 = vld [vmem:[#allocation5 + $0x10] sm:$0xff]
    %v269 = vld [vmem:[#allocation5 + $0x18] sm:$0xff]
    %v270 = vld [vmem:[#allocation5 + $0x20] sm:$0xff]
    %v271 = vld [vmem:[#allocation5 + $0x28] sm:$0xff]
    %v272 = vld [vmem:[#allocation5 + $0x30] sm:$0xff]
    %v273 = vld [vmem:[#allocation5 + $0x38] sm:$0xff]
    %v274 = vld [vmem:[#allocation5 + $0x40] sm:$0xff]
    %v275 = vld [vmem:[#allocation5 + $0x48] sm:$0xff]
    %v276 = vld [vmem:[#allocation5 + $0x50] sm:$0xff]
    %v277 = vld [vmem:[#allocation5 + $0x58] sm:$0xff]
    %v278 = vld [vmem:[#allocation5 + $0x60] sm:$0xff]
    %v279 = vld [vmem:[#allocation5 + $0x68] sm:$0xff]
    %v280 = vld [vmem:[#allocation5 + $0x70] sm:$0xff]
    %v281 = vld [vmem:[#allocation5 + $0x78] sm:$0xff]
    %v284 = vcombine.low %v264, %v265
    %286 = vmatprep.subr.mxu0 0.0
    %287 = vmatpush1.msra.mxu0 %v266
    %288 = vmatprep.subr.mxu0 0.0
    %289 = vmatpush1.msra.mxu0 %v267
    %290 = vmatprep.subr.mxu0 0.0
    %291 = vmatpush1.msra.mxu0 %v268
    %292 = vmatprep.subr.mxu0 0.0
    %293 = vmatpush1.msra.mxu0 %v269
    %294 = vmatprep.subr.mxu0 0.0
    %295 = vmatpush1.msra.mxu0 %v270
    %296 = vmatprep.subr.mxu0 0.0
    %297 = vmatpush1.msra.mxu0 %v271
    %298 = vmatprep.subr.mxu0 0.0
    %299 = vmatpush1.msra.mxu0 %v272
    %300 = vmatprep.subr.mxu0 0.0
    %301 = vmatpush1.msra.mxu0 %v273
    %302 = vmatprep.subr.mxu0 0.0
    %303 = vmatpush1.msra.mxu0 %v274
    %304 = vmatprep.subr.mxu0 0.0
    %305 = vmatpush1.msra.mxu0 %v275
    %306 = vmatprep.subr.mxu0 0.0
    %307 = vmatpush1.msra.mxu0 %v276
    %308 = vmatprep.subr.mxu0 0.0
    %309 = vmatpush1.msra.mxu0 %v277
    %310 = vmatprep.subr.mxu0 0.0
    %311 = vmatpush1.msra.mxu0 %v278
    %312 = vmatprep.subr.mxu0 0.0
    %313 = vmatpush1.msra.mxu0 %v279
    %314 = vmatprep.subr.mxu0 0.0
    %315 = vmatpush1.msra.mxu0 %v280
    %316 = vmatprep.subr.mxu0 0.0
    %317 = vmatpush1.msra.mxu0 %v281
    %318 = vmatprep.subr.mxu0 0.0
    %319 = vmatpush1.msra.mxu0 0.0
    %320 = vmatprep.subr.mxu0 0.0
    %321 = vmatpush1.msra.mxu0 0.0
    %322 = vmatprep.subr.mxu0 0.0
    %323 = vmatpush1.msra.mxu0 0.0
    %324 = vmatprep.subr.mxu0 0.0
    %325 = vmatpush1.msra.mxu0 0.0
    %326 = vmatprep.subr.mxu0 0.0
    %327 = vmatpush1.msra.mxu0 0.0
    %328 = vmatprep.subr.mxu0 0.0
    %329 = vmatpush1.msra.mxu0 0.0
    %330 = vmatprep.subr.mxu0 0.0
    %331 = vmatpush1.msra.mxu0 0.0
    %332 = vmatprep.subr.mxu0 0.0
    %333 = vmatpush1.msra.mxu0 0.0
    %334 = vmatprep.subr.mxu0 0.0
    %335 = vmatpush1.msra.mxu0 0.0
    %336 = vmatprep.subr.mxu0 0.0
    %337 = vmatpush1.msra.mxu0 0.0
    %338 = vmatprep.subr.mxu0 0.0
    %339 = vmatpush1.msra.mxu0 0.0
    %340 = vmatprep.subr.mxu0 0.0
    %341 = vmatpush1.msra.mxu0 0.0
    %342 = vmatprep.subr.mxu0 0.0
    %343 = vmatpush1.msra.mxu0 0.0
    %344 = vmatprep.subr.mxu0 0.0
    %345 = vmatpush1.msra.mxu0 0.0
    %346 = vmatprep.subr.mxu0 0.0
    %347 = vmatpush1.msra.mxu0 0.0
    %348 = vmatprep.subr.mxu0 0.0
    %349 = vmatpush1.msra.mxu0 0.0
    %350 = vmatprep.mubr.f32.mxu0 0.0
    %351 = vmatmul.mubr.f32.gmra.mrb[0].mxu0 %v284
    %v352 = vpop.f32.mrb[0].mxu0
    %v353 = vadd.f32 0.0, %v352
    %v354 = vpop.f32.mrb[0].mxu0
    %355 = vdwg.mxu0
    %v356 = vrot.slane %v353, 4
    %v357 = vadd.f32 %v353, %v356
    %v358 = vrot.slane %v357, 2
    %v359 = vadd.f32 %v357, %v358
    %v360 = vrot.slane %v359, 1
    %v361 = vadd.f32 %v359, %v360
    %v362 = vrcp.pop 8.0
    %v363 = vmul.f32 %v361, %v362
    %v364 = vsub.f32 %v353, %v363
    %v365 = vmul.f32 %v364, %v364
    %v366 = vrot.slane %v365, 4
    %v367 = vadd.f32 %v365, %v366
    %v368 = vrot.slane %v367, 2
    %v369 = vadd.f32 %v367, %v368
    %v370 = vrot.slane %v369, 1
    %v371 = vadd.f32 %v369, %v370
    %v372 = vmul.f32 %v371, %v362
    %v373 = vadd.f32 %v372, 1e-05
    %v374 = vrsqrt.pop %v373
    %v375 = vmul.f32 %v364, %v374
    %v376 = vld [vmem:[#allocation7] sm:$0x1]
    %v378 = vlaneseq
    %v379 = vshrl.u32 %v378, 7
    %v380 = vsub.s32 0, %v379
    %v381 = vrot.slane %v376, %v380
    %v383 = vmul.f32 %v375, %v381
    %v384 = vld [vmem:[#allocation8] sm:$0x1]
    %v386 = vlaneseq
    %v387 = vshrl.u32 %v386, 7
    %v388 = vsub.s32 0, %v387
    %v389 = vrot.slane %v384, %v388
    %v391 = vadd.f32 %v383, %v389
    %v392 = vmax.f32 %v391, 0.0
    %v394 = vcombine.high %v392, %v392
    %v395 = vlaneseq
    %v396 = vshrl.u32 %v395, 7
    %v397 = vsub.s32 0, %v396
    %v398 = vrot.slane %v392, %v397
    %v399 = vlaneseq
    %v400 = vshrl.u32 %v399, 7
    %v401 = vsub.s32 0, %v400
    %v402 = vrot.slane %v394, %v401
    %vm403 = vcmask 1041409
    %v404 = vsel %vm403, %v402, %v398
    %v406 = vlaneseq
    %v407 = vshrl.u32 %v406, 7
    %v408 = vsub.s32 1, %v407
    %v409 = vrot.slane %v392, %v408
    %v410 = vlaneseq
    %v411 = vshrl.u32 %v410, 7
    %v412 = vsub.s32 1, %v411
    %v413 = vrot.slane %v394, %v412
    %v414 = vsel %vm403, %v413, %v409
    %v416 = vlaneseq
    %v417 = vshrl.u32 %v416, 7
    %v418 = vsub.s32 2, %v417
    %v419 = vrot.slane %v392, %v418
    %v420 = vlaneseq
    %v421 = vshrl.u32 %v420, 7
    %v422 = vsub.s32 2, %v421
    %v423 = vrot.slane %v394, %v422
    %v424 = vsel %vm403, %v423, %v419
    %v426 = vlaneseq
    %v427 = vshrl.u32 %v426, 7
    %v428 = vsub.s32 3, %v427
    %v429 = vrot.slane %v392, %v428
    %v430 = vlaneseq
    %v431 = vshrl.u32 %v430, 7
    %v432 = vsub.s32 3, %v431
    %v433 = vrot.slane %v394, %v432
    %v434 = vsel %vm403, %v433, %v429
    %v436 = vld [vmem:[#allocation10] sm:$0xff]
    %v437 = vld [vmem:[#allocation10 + $0x8] sm:$0xff]
    %v438 = vld [vmem:[#allocation10 + $0x10] sm:$0xff]
    %v439 = vld [vmem:[#allocation10 + $0x18] sm:$0xff]
    %v440 = vld [vmem:[#allocation10 + $0x20] sm:$0xff]
    %v441 = vld [vmem:[#allocation10 + $0x28] sm:$0xff]
    %v442 = vld [vmem:[#allocation10 + $0x30] sm:$0xff]
    %v443 = vld [vmem:[#allocation10 + $0x38] sm:$0xff]
    %v444 = vld [vmem:[#allocation10 + $0x40] sm:$0xff]
    %v445 = vld [vmem:[#allocation10 + $0x48] sm:$0xff]
    %v446 = vld [vmem:[#allocation10 + $0x50] sm:$0xff]
    %v447 = vld [vmem:[#allocation10 + $0x58] sm:$0xff]
    %v448 = vld [vmem:[#allocation10 + $0x60] sm:$0xff]
    %v449 = vld [vmem:[#allocation10 + $0x68] sm:$0xff]
    %v450 = vld [vmem:[#allocation10 + $0x70] sm:$0xff]
    %v451 = vld [vmem:[#allocation10 + $0x78] sm:$0xff]
    %v452 = vld [vmem:[#allocation10 + $0x80] sm:$0xff]
    %v453 = vld [vmem:[#allocation10 + $0x88] sm:$0xff]
    %v454 = vld [vmem:[#allocation10 + $0x90] sm:$0xff]
    %v455 = vld [vmem:[#allocation10 + $0x98] sm:$0xff]
    %v456 = vld [vmem:[#allocation10 + $0xa0] sm:$0xff]
    %v457 = vld [vmem:[#allocation10 + $0xa8] sm:$0xff]
    %v458 = vld [vmem:[#allocation10 + $0xb0] sm:$0xff]
    %v459 = vld [vmem:[#allocation10 + $0xb8] sm:$0xff]
    %v460 = vld [vmem:[#allocation10 + $0xc0] sm:$0xff]
    %v461 = vld [vmem:[#allocation10 + $0xc8] sm:$0xff]
    %v462 = vld [vmem:[#allocation10 + $0xd0] sm:$0xff]
    %v463 = vld [vmem:[#allocation10 + $0xd8] sm:$0xff]
    %v464 = vld [vmem:[#allocation10 + $0xe0] sm:$0xff]
    %v465 = vld [vmem:[#allocation10 + $0xe8] sm:$0xff]
    %v466 = vld [vmem:[#allocation10 + $0xf0] sm:$0xff]
    %v467 = vld [vmem:[#allocation10 + $0xf8] sm:$0xff]
    %v468 = vld [vmem:[#allocation10 + $0x100] sm:$0xff]
    %v469 = vld [vmem:[#allocation10 + $0x108] sm:$0xff]
    %v470 = vld [vmem:[#allocation10 + $0x110] sm:$0xff]
    %v471 = vld [vmem:[#allocation10 + $0x118] sm:$0xff]
    %v472 = vld [vmem:[#allocation10 + $0x120] sm:$0xff]
    %v473 = vld [vmem:[#allocation10 + $0x128] sm:$0xff]
    %v474 = vld [vmem:[#allocation10 + $0x130] sm:$0xff]
    %v475 = vld [vmem:[#allocation10 + $0x138] sm:$0xff]
    %v476 = vld [vmem:[#allocation10 + $0x140] sm:$0xff]
    %v477 = vld [vmem:[#allocation10 + $0x148] sm:$0xff]
    %v478 = vld [vmem:[#allocation10 + $0x150] sm:$0xff]
    %v479 = vld [vmem:[#allocation10 + $0x158] sm:$0xff]
    %v480 = vld [vmem:[#allocation10 + $0x160] sm:$0xff]
    %v481 = vld [vmem:[#allocation10 + $0x168] sm:$0xff]
    %v482 = vld [vmem:[#allocation10 + $0x170] sm:$0xff]
    %v483 = vld [vmem:[#allocation10 + $0x178] sm:$0xff]
    %v484 = vld [vmem:[#allocation10 + $0x180] sm:$0xff]
    %v485 = vld [vmem:[#allocation10 + $0x188] sm:$0xff]
    %v486 = vld [vmem:[#allocation10 + $0x190] sm:$0xff]
    %v487 = vld [vmem:[#allocation10 + $0x198] sm:$0xff]
    %v488 = vld [vmem:[#allocation10 + $0x1a0] sm:$0xff]
    %v489 = vld [vmem:[#allocation10 + $0x1a8] sm:$0xff]
    %v490 = vld [vmem:[#allocation10 + $0x1b0] sm:$0xff]
    %v491 = vld [vmem:[#allocation10 + $0x1b8] sm:$0xff]
    %v492 = vld [vmem:[#allocation10 + $0x1c0] sm:$0xff]
    %v493 = vld [vmem:[#allocation10 + $0x1c8] sm:$0xff]
    %v494 = vld [vmem:[#allocation10 + $0x1d0] sm:$0xff]
    %v495 = vld [vmem:[#allocation10 + $0x1d8] sm:$0xff]
    %v496 = vld [vmem:[#allocation10 + $0x1e0] sm:$0xff]
    %v497 = vld [vmem:[#allocation10 + $0x1e8] sm:$0xff]
    %v498 = vld [vmem:[#allocation10 + $0x1f0] sm:$0xff]
    %v499 = vld [vmem:[#allocation10 + $0x1f8] sm:$0xff]
    %v500 = vld [vmem:[#allocation10 + $0x200] sm:$0xff]
    %v501 = vld [vmem:[#allocation10 + $0x208] sm:$0xff]
    %v502 = vld [vmem:[#allocation10 + $0x210] sm:$0xff]
    %v503 = vld [vmem:[#allocation10 + $0x218] sm:$0xff]
    %v504 = vld [vmem:[#allocation10 + $0x220] sm:$0xff]
    %v505 = vld [vmem:[#allocation10 + $0x228] sm:$0xff]
    %v506 = vld [vmem:[#allocation10 + $0x230] sm:$0xff]
    %v507 = vld [vmem:[#allocation10 + $0x238] sm:$0xff]
    %v508 = vld [vmem:[#allocation10 + $0x240] sm:$0xff]
    %v509 = vld [vmem:[#allocation10 + $0x248] sm:$0xff]
    %v510 = vld [vmem:[#allocation10 + $0x250] sm:$0xff]
    %v511 = vld [vmem:[#allocation10 + $0x258] sm:$0xff]
    %v512 = vld [vmem:[#allocation10 + $0x260] sm:$0xff]
    %v513 = vld [vmem:[#allocation10 + $0x268] sm:$0xff]
    %v514 = vld [vmem:[#allocation10 + $0x270] sm:$0xff]
    %v515 = vld [vmem:[#allocation10 + $0x278] sm:$0xff]
    %v516 = vld [vmem:[#allocation10 + $0x280] sm:$0xff]
    %v517 = vld [vmem:[#allocation10 + $0x288] sm:$0xff]
    %v518 = vld [vmem:[#allocation10 + $0x290] sm:$0xff]
    %v519 = vld [vmem:[#allocation10 + $0x298] sm:$0xff]
    %v520 = vld [vmem:[#allocation10 + $0x2a0] sm:$0xff]
    %v521 = vld [vmem:[#allocation10 + $0x2a8] sm:$0xff]
    %v522 = vld [vmem:[#allocation10 + $0x2b0] sm:$0xff]
    %v523 = vld [vmem:[#allocation10 + $0x2b8] sm:$0xff]
    %v524 = vld [vmem:[#allocation10 + $0x2c0] sm:$0xff]
    %v525 = vld [vmem:[#allocation10 + $0x2c8] sm:$0xff]
    %v526 = vld [vmem:[#allocation10 + $0x2d0] sm:$0xff]
    %v527 = vld [vmem:[#allocation10 + $0x2d8] sm:$0xff]
    %v528 = vld [vmem:[#allocation10 + $0x2e0] sm:$0xff]
    %v529 = vld [vmem:[#allocation10 + $0x2e8] sm:$0xff]
    %v530 = vld [vmem:[#allocation10 + $0x2f0] sm:$0xff]
    %v531 = vld [vmem:[#allocation10 + $0x2f8] sm:$0xff]
    %v532 = vld [vmem:[#allocation10 + $0x300] sm:$0xff]
    %v533 = vld [vmem:[#allocation10 + $0x308] sm:$0xff]
    %v534 = vld [vmem:[#allocation10 + $0x310] sm:$0xff]
    %v535 = vld [vmem:[#allocation10 + $0x318] sm:$0xff]
    %v536 = vld [vmem:[#allocation10 + $0x320] sm:$0xff]
    %v537 = vld [vmem:[#allocation10 + $0x328] sm:$0xff]
    %v538 = vld [vmem:[#allocation10 + $0x330] sm:$0xff]
    %v539 = vld [vmem:[#allocation10 + $0x338] sm:$0xff]
    %v540 = vld [vmem:[#allocation10 + $0x340] sm:$0xff]
    %v541 = vld [vmem:[#allocation10 + $0x348] sm:$0xff]
    %v542 = vld [vmem:[#allocation10 + $0x350] sm:$0xff]
    %v543 = vld [vmem:[#allocation10 + $0x358] sm:$0xff]
    %v544 = vld [vmem:[#allocation10 + $0x360] sm:$0xff]
    %v545 = vld [vmem:[#allocation10 + $0x368] sm:$0xff]
    %v546 = vld [vmem:[#allocation10 + $0x370] sm:$0xff]
    %v547 = vld [vmem:[#allocation10 + $0x378] sm:$0xff]
    %v548 = vld [vmem:[#allocation10 + $0x380] sm:$0xff]
    %v549 = vld [vmem:[#allocation10 + $0x388] sm:$0xff]
    %v550 = vld [vmem:[#allocation10 + $0x390] sm:$0xff]
    %v551 = vld [vmem:[#allocation10 + $0x398] sm:$0xff]
    %v552 = vld [vmem:[#allocation10 + $0x3a0] sm:$0xff]
    %v553 = vld [vmem:[#allocation10 + $0x3a8] sm:$0xff]
    %v554 = vld [vmem:[#allocation10 + $0x3b0] sm:$0xff]
    %v555 = vld [vmem:[#allocation10 + $0x3b8] sm:$0xff]
    %v556 = vld [vmem:[#allocation10 + $0x3c0] sm:$0xff]
    %v557 = vld [vmem:[#allocation10 + $0x3c8] sm:$0xff]
    %v558 = vld [vmem:[#allocation10 + $0x3d0] sm:$0xff]
    %v559 = vld [vmem:[#allocation10 + $0x3d8] sm:$0xff]
    %v560 = vld [vmem:[#allocation10 + $0x3e0] sm:$0xff]
    %v561 = vld [vmem:[#allocation10 + $0x3e8] sm:$0xff]
    %v562 = vld [vmem:[#allocation10 + $0x3f0] sm:$0xff]
    %v563 = vld [vmem:[#allocation10 + $0x3f8] sm:$0xff]
    %v564 = vld [vmem:[#allocation10 + $0x400] sm:$0xff]
    %v565 = vld [vmem:[#allocation10 + $0x408] sm:$0xff]
    %v566 = vld [vmem:[#allocation10 + $0x410] sm:$0xff]
    %v567 = vld [vmem:[#allocation10 + $0x418] sm:$0xff]
    %v568 = vld [vmem:[#allocation10 + $0x420] sm:$0xff]
    %v569 = vld [vmem:[#allocation10 + $0x428] sm:$0xff]
    %v570 = vld [vmem:[#allocation10 + $0x430] sm:$0xff]
    %v571 = vld [vmem:[#allocation10 + $0x438] sm:$0xff]
    %v572 = vld [vmem:[#allocation10 + $0x440] sm:$0xff]
    %v573 = vld [vmem:[#allocation10 + $0x448] sm:$0xff]
    %v574 = vld [vmem:[#allocation10 + $0x450] sm:$0xff]
    %v575 = vld [vmem:[#allocation10 + $0x458] sm:$0xff]
    %v576 = vld [vmem:[#allocation10 + $0x460] sm:$0xff]
    %v577 = vld [vmem:[#allocation10 + $0x468] sm:$0xff]
    %v578 = vld [vmem:[#allocation10 + $0x470] sm:$0xff]
    %v579 = vld [vmem:[#allocation10 + $0x478] sm:$0xff]
    %v580 = vld [vmem:[#allocation10 + $0x480] sm:$0xff]
    %v581 = vld [vmem:[#allocation10 + $0x488] sm:$0xff]
    %v582 = vld [vmem:[#allocation10 + $0x490] sm:$0xff]
    %v583 = vld [vmem:[#allocation10 + $0x498] sm:$0xff]
    %v584 = vld [vmem:[#allocation10 + $0x4a0] sm:$0xff]
    %v585 = vld [vmem:[#allocation10 + $0x4a8] sm:$0xff]
    %v586 = vld [vmem:[#allocation10 + $0x4b0] sm:$0xff]
    %v587 = vld [vmem:[#allocation10 + $0x4b8] sm:$0xff]
    %v588 = vld [vmem:[#allocation10 + $0x4c0] sm:$0xff]
    %v589 = vld [vmem:[#allocation10 + $0x4c8] sm:$0xff]
    %v590 = vld [vmem:[#allocation10 + $0x4d0] sm:$0xff]
    %v591 = vld [vmem:[#allocation10 + $0x4d8] sm:$0xff]
    %v592 = vld [vmem:[#allocation10 + $0x4e0] sm:$0xff]
    %v593 = vld [vmem:[#allocation10 + $0x4e8] sm:$0xff]
    %v594 = vld [vmem:[#allocation10 + $0x4f0] sm:$0xff]
    %v595 = vld [vmem:[#allocation10 + $0x4f8] sm:$0xff]
    %v596 = vld [vmem:[#allocation10 + $0x500] sm:$0xff]
    %v597 = vld [vmem:[#allocation10 + $0x508] sm:$0xff]
    %v598 = vld [vmem:[#allocation10 + $0x510] sm:$0xff]
    %v599 = vld [vmem:[#allocation10 + $0x518] sm:$0xff]
    %v600 = vld [vmem:[#allocation10 + $0x520] sm:$0xff]
    %v601 = vld [vmem:[#allocation10 + $0x528] sm:$0xff]
    %v602 = vld [vmem:[#allocation10 + $0x530] sm:$0xff]
    %v603 = vld [vmem:[#allocation10 + $0x538] sm:$0xff]
    %v604 = vld [vmem:[#allocation10 + $0x540] sm:$0xff]
    %v605 = vld [vmem:[#allocation10 + $0x548] sm:$0xff]
    %v606 = vld [vmem:[#allocation10 + $0x550] sm:$0xff]
    %v607 = vld [vmem:[#allocation10 + $0x558] sm:$0xff]
    %v608 = vld [vmem:[#allocation10 + $0x560] sm:$0xff]
    %v609 = vld [vmem:[#allocation10 + $0x568] sm:$0xff]
    %v610 = vld [vmem:[#allocation10 + $0x570] sm:$0xff]
    %v611 = vld [vmem:[#allocation10 + $0x578] sm:$0xff]
    %v612 = vld [vmem:[#allocation10 + $0x580] sm:$0xff]
    %v613 = vld [vmem:[#allocation10 + $0x588] sm:$0xff]
    %v614 = vld [vmem:[#allocation10 + $0x590] sm:$0xff]
    %v615 = vld [vmem:[#allocation10 + $0x598] sm:$0xff]
    %v616 = vld [vmem:[#allocation10 + $0x5a0] sm:$0xff]
    %v617 = vld [vmem:[#allocation10 + $0x5a8] sm:$0xff]
    %v618 = vld [vmem:[#allocation10 + $0x5b0] sm:$0xff]
    %v619 = vld [vmem:[#allocation10 + $0x5b8] sm:$0xff]
    %v620 = vld [vmem:[#allocation10 + $0x5c0] sm:$0xff]
    %v621 = vld [vmem:[#allocation10 + $0x5c8] sm:$0xff]
    %v622 = vld [vmem:[#allocation10 + $0x5d0] sm:$0xff]
    %v623 = vld [vmem:[#allocation10 + $0x5d8] sm:$0xff]
    %v624 = vld [vmem:[#allocation10 + $0x5e0] sm:$0xff]
    %v625 = vld [vmem:[#allocation10 + $0x5e8] sm:$0xff]
    %v626 = vld [vmem:[#allocation10 + $0x5f0] sm:$0xff]
    %v627 = vld [vmem:[#allocation10 + $0x5f8] sm:$0xff]
    %v628 = vld [vmem:[#allocation10 + $0x600] sm:$0xff]
    %v629 = vld [vmem:[#allocation10 + $0x608] sm:$0xff]
    %v630 = vld [vmem:[#allocation10 + $0x610] sm:$0xff]
    %v631 = vld [vmem:[#allocation10 + $0x618] sm:$0xff]
    %v632 = vld [vmem:[#allocation10 + $0x620] sm:$0xff]
    %v633 = vld [vmem:[#allocation10 + $0x628] sm:$0xff]
    %v634 = vld [vmem:[#allocation10 + $0x630] sm:$0xff]
    %v635 = vld [vmem:[#allocation10 + $0x638] sm:$0xff]
    %v636 = vld [vmem:[#allocation10 + $0x640] sm:$0xff]
    %v637 = vld [vmem:[#allocation10 + $0x648] sm:$0xff]
    %v638 = vld [vmem:[#allocation10 + $0x650] sm:$0xff]
    %v639 = vld [vmem:[#allocation10 + $0x658] sm:$0xff]
    %v640 = vld [vmem:[#allocation10 + $0x660] sm:$0xff]
    %v641 = vld [vmem:[#allocation10 + $0x668] sm:$0xff]
    %v642 = vld [vmem:[#allocation10 + $0x670] sm:$0xff]
    %v643 = vld [vmem:[#allocation10 + $0x678] sm:$0xff]
    %v644 = vld [vmem:[#allocation10 + $0x680] sm:$0xff]
    %v645 = vld [vmem:[#allocation10 + $0x688] sm:$0xff]
    %v646 = vld [vmem:[#allocation10 + $0x690] sm:$0xff]
    %v647 = vld [vmem:[#allocation10 + $0x698] sm:$0xff]
    %v648 = vld [vmem:[#allocation10 + $0x6a0] sm:$0xff]
    %v649 = vld [vmem:[#allocation10 + $0x6a8] sm:$0xff]
    %v650 = vld [vmem:[#allocation10 + $0x6b0] sm:$0xff]
    %v651 = vld [vmem:[#allocation10 + $0x6b8] sm:$0xff]
    %v652 = vld [vmem:[#allocation10 + $0x6c0] sm:$0xff]
    %v653 = vld [vmem:[#allocation10 + $0x6c8] sm:$0xff]
    %v654 = vld [vmem:[#allocation10 + $0x6d0] sm:$0xff]
    %v655 = vld [vmem:[#allocation10 + $0x6d8] sm:$0xff]
    %v656 = vld [vmem:[#allocation10 + $0x6e0] sm:$0xff]
    %v657 = vld [vmem:[#allocation10 + $0x6e8] sm:$0xff]
    %v658 = vld [vmem:[#allocation10 + $0x6f0] sm:$0xff]
    %v659 = vld [vmem:[#allocation10 + $0x6f8] sm:$0xff]
    %v660 = vld [vmem:[#allocation10 + $0x700] sm:$0xff]
    %v661 = vld [vmem:[#allocation10 + $0x708] sm:$0xff]
    %v662 = vld [vmem:[#allocation10 + $0x710] sm:$0xff]
    %v663 = vld [vmem:[#allocation10 + $0x718] sm:$0xff]
    %v664 = vld [vmem:[#allocation10 + $0x720] sm:$0xff]
    %v665 = vld [vmem:[#allocation10 + $0x728] sm:$0xff]
    %v666 = vld [vmem:[#allocation10 + $0x730] sm:$0xff]
    %v667 = vld [vmem:[#allocation10 + $0x738] sm:$0xff]
    %v668 = vld [vmem:[#allocation10 + $0x740] sm:$0xff]
    %v669 = vld [vmem:[#allocation10 + $0x748] sm:$0xff]
    %v670 = vld [vmem:[#allocation10 + $0x750] sm:$0xff]
    %v671 = vld [vmem:[#allocation10 + $0x758] sm:$0xff]
    %v672 = vld [vmem:[#allocation10 + $0x760] sm:$0xff]
    %v673 = vld [vmem:[#allocation10 + $0x768] sm:$0xff]
    %v674 = vld [vmem:[#allocation10 + $0x770] sm:$0xff]
    %v675 = vld [vmem:[#allocation10 + $0x778] sm:$0xff]
    %v676 = vld [vmem:[#allocation10 + $0x780] sm:$0xff]
    %v677 = vld [vmem:[#allocation10 + $0x788] sm:$0xff]
    %v678 = vld [vmem:[#allocation10 + $0x790] sm:$0xff]
    %v679 = vld [vmem:[#allocation10 + $0x798] sm:$0xff]
    %v680 = vld [vmem:[#allocation10 + $0x7a0] sm:$0xff]
    %v681 = vld [vmem:[#allocation10 + $0x7a8] sm:$0xff]
    %v682 = vld [vmem:[#allocation10 + $0x7b0] sm:$0xff]
    %v683 = vld [vmem:[#allocation10 + $0x7b8] sm:$0xff]
    %v684 = vld [vmem:[#allocation10 + $0x7c0] sm:$0xff]
    %v685 = vld [vmem:[#allocation10 + $0x7c8] sm:$0xff]
    %v686 = vld [vmem:[#allocation10 + $0x7d0] sm:$0xff]
    %v687 = vld [vmem:[#allocation10 + $0x7d8] sm:$0xff]
    %v688 = vld [vmem:[#allocation10 + $0x7e0] sm:$0xff]
    %v689 = vld [vmem:[#allocation10 + $0x7e8] sm:$0xff]
    %v690 = vld [vmem:[#allocation10 + $0x7f0] sm:$0xff]
    %v691 = vld [vmem:[#allocation10 + $0x7f8] sm:$0xff]
    %v692 = vld [vmem:[#allocation10 + $0x800] sm:$0xff]
    %v693 = vld [vmem:[#allocation10 + $0x808] sm:$0xff]
    %v694 = vld [vmem:[#allocation10 + $0x810] sm:$0xff]
    %v695 = vld [vmem:[#allocation10 + $0x818] sm:$0xff]
    %v696 = vld [vmem:[#allocation10 + $0x820] sm:$0xff]
    %v697 = vld [vmem:[#allocation10 + $0x828] sm:$0xff]
    %v698 = vld [vmem:[#allocation10 + $0x830] sm:$0xff]
    %v699 = vld [vmem:[#allocation10 + $0x838] sm:$0xff]
    %v700 = vld [vmem:[#allocation10 + $0x840] sm:$0xff]
    %v701 = vld [vmem:[#allocation10 + $0x848] sm:$0xff]
    %v702 = vld [vmem:[#allocation10 + $0x850] sm:$0xff]
    %v703 = vld [vmem:[#allocation10 + $0x858] sm:$0xff]
    %v704 = vld [vmem:[#allocation10 + $0x860] sm:$0xff]
    %v705 = vld [vmem:[#allocation10 + $0x868] sm:$0xff]
    %v706 = vld [vmem:[#allocation10 + $0x870] sm:$0xff]
    %v707 = vld [vmem:[#allocation10 + $0x878] sm:$0xff]
    %v708 = vld [vmem:[#allocation10 + $0x880] sm:$0xff]
    %v709 = vld [vmem:[#allocation10 + $0x888] sm:$0xff]
    %v710 = vld [vmem:[#allocation10 + $0x890] sm:$0xff]
    %v711 = vld [vmem:[#allocation10 + $0x898] sm:$0xff]
    %v712 = vld [vmem:[#allocation10 + $0x8a0] sm:$0xff]
    %v713 = vld [vmem:[#allocation10 + $0x8a8] sm:$0xff]
    %v714 = vld [vmem:[#allocation10 + $0x8b0] sm:$0xff]
    %v715 = vld [vmem:[#allocation10 + $0x8b8] sm:$0xff]
    %v716 = vld [vmem:[#allocation10 + $0x8c0] sm:$0xff]
    %v717 = vld [vmem:[#allocation10 + $0x8c8] sm:$0xff]
    %v718 = vld [vmem:[#allocation10 + $0x8d0] sm:$0xff]
    %v719 = vld [vmem:[#allocation10 + $0x8d8] sm:$0xff]
    %v720 = vld [vmem:[#allocation10 + $0x8e0] sm:$0xff]
    %v721 = vld [vmem:[#allocation10 + $0x8e8] sm:$0xff]
    %v722 = vld [vmem:[#allocation10 + $0x8f0] sm:$0xff]
    %v723 = vld [vmem:[#allocation10 + $0x8f8] sm:$0xff]
    %v724 = vld [vmem:[#allocation10 + $0x900] sm:$0xff]
    %v725 = vld [vmem:[#allocation10 + $0x908] sm:$0xff]
    %v726 = vld [vmem:[#allocation10 + $0x910] sm:$0xff]
    %v727 = vld [vmem:[#allocation10 + $0x918] sm:$0xff]
    %v728 = vld [vmem:[#allocation10 + $0x920] sm:$0xff]
    %v729 = vld [vmem:[#allocation10 + $0x928] sm:$0xff]
    %v730 = vld [vmem:[#allocation10 + $0x930] sm:$0xff]
    %v731 = vld [vmem:[#allocation10 + $0x938] sm:$0xff]
    %v732 = vld [vmem:[#allocation10 + $0x940] sm:$0xff]
    %v733 = vld [vmem:[#allocation10 + $0x948] sm:$0xff]
    %v734 = vld [vmem:[#allocation10 + $0x950] sm:$0xff]
    %v735 = vld [vmem:[#allocation10 + $0x958] sm:$0xff]
    %v736 = vld [vmem:[#allocation10 + $0x960] sm:$0xff]
    %v737 = vld [vmem:[#allocation10 + $0x968] sm:$0xff]
    %v738 = vld [vmem:[#allocation10 + $0x970] sm:$0xff]
    %v739 = vld [vmem:[#allocation10 + $0x978] sm:$0xff]
    %v740 = vld [vmem:[#allocation10 + $0x980] sm:$0xff]
    %v741 = vld [vmem:[#allocation10 + $0x988] sm:$0xff]
    %v742 = vld [vmem:[#allocation10 + $0x990] sm:$0xff]
    %v743 = vld [vmem:[#allocation10 + $0x998] sm:$0xff]
    %v744 = vld [vmem:[#allocation10 + $0x9a0] sm:$0xff]
    %v745 = vld [vmem:[#allocation10 + $0x9a8] sm:$0xff]
    %v746 = vld [vmem:[#allocation10 + $0x9b0] sm:$0xff]
    %v747 = vld [vmem:[#allocation10 + $0x9b8] sm:$0xff]
    %v748 = vld [vmem:[#allocation10 + $0x9c0] sm:$0xff]
    %v749 = vld [vmem:[#allocation10 + $0x9c8] sm:$0xff]
    %v750 = vld [vmem:[#allocation10 + $0x9d0] sm:$0xff]
    %v751 = vld [vmem:[#allocation10 + $0x9d8] sm:$0xff]
    %v752 = vld [vmem:[#allocation10 + $0x9e0] sm:$0xff]
    %v753 = vld [vmem:[#allocation10 + $0x9e8] sm:$0xff]
    %v754 = vld [vmem:[#allocation10 + $0x9f0] sm:$0xff]
    %v755 = vld [vmem:[#allocation10 + $0x9f8] sm:$0xff]
    %v756 = vld [vmem:[#allocation10 + $0xa00] sm:$0xff]
    %v757 = vld [vmem:[#allocation10 + $0xa08] sm:$0xff]
    %v758 = vld [vmem:[#allocation10 + $0xa10] sm:$0xff]
    %v759 = vld [vmem:[#allocation10 + $0xa18] sm:$0xff]
    %v760 = vld [vmem:[#allocation10 + $0xa20] sm:$0xff]
    %v761 = vld [vmem:[#allocation10 + $0xa28] sm:$0xff]
    %v762 = vld [vmem:[#allocation10 + $0xa30] sm:$0xff]
    %v763 = vld [vmem:[#allocation10 + $0xa38] sm:$0xff]
    %v764 = vld [vmem:[#allocation10 + $0xa40] sm:$0xff]
    %v765 = vld [vmem:[#allocation10 + $0xa48] sm:$0xff]
    %v766 = vld [vmem:[#allocation10 + $0xa50] sm:$0xff]
    %v767 = vld [vmem:[#allocation10 + $0xa58] sm:$0xff]
    %v768 = vld [vmem:[#allocation10 + $0xa60] sm:$0xff]
    %v769 = vld [vmem:[#allocation10 + $0xa68] sm:$0xff]
    %v770 = vld [vmem:[#allocation10 + $0xa70] sm:$0xff]
    %v771 = vld [vmem:[#allocation10 + $0xa78] sm:$0xff]
    %v772 = vld [vmem:[#allocation10 + $0xa80] sm:$0xff]
    %v773 = vld [vmem:[#allocation10 + $0xa88] sm:$0xff]
    %v774 = vld [vmem:[#allocation10 + $0xa90] sm:$0xff]
    %v775 = vld [vmem:[#allocation10 + $0xa98] sm:$0xff]
    %v776 = vld [vmem:[#allocation10 + $0xaa0] sm:$0xff]
    %v777 = vld [vmem:[#allocation10 + $0xaa8] sm:$0xff]
    %v778 = vld [vmem:[#allocation10 + $0xab0] sm:$0xff]
    %v779 = vld [vmem:[#allocation10 + $0xab8] sm:$0xff]
    %v780 = vld [vmem:[#allocation10 + $0xac0] sm:$0xff]
    %v781 = vld [vmem:[#allocation10 + $0xac8] sm:$0xff]
    %v782 = vld [vmem:[#allocation10 + $0xad0] sm:$0xff]
    %v783 = vld [vmem:[#allocation10 + $0xad8] sm:$0xff]
    %v784 = vld [vmem:[#allocation10 + $0xae0] sm:$0xff]
    %v785 = vld [vmem:[#allocation10 + $0xae8] sm:$0xff]
    %v786 = vld [vmem:[#allocation10 + $0xaf0] sm:$0xff]
    %v787 = vld [vmem:[#allocation10 + $0xaf8] sm:$0xff]
    %v788 = vld [vmem:[#allocation10 + $0xb00] sm:$0xff]
    %v789 = vld [vmem:[#allocation10 + $0xb08] sm:$0xff]
    %v790 = vld [vmem:[#allocation10 + $0xb10] sm:$0xff]
    %v791 = vld [vmem:[#allocation10 + $0xb18] sm:$0xff]
    %v792 = vld [vmem:[#allocation10 + $0xb20] sm:$0xff]
    %v793 = vld [vmem:[#allocation10 + $0xb28] sm:$0xff]
    %v794 = vld [vmem:[#allocation10 + $0xb30] sm:$0xff]
    %v795 = vld [vmem:[#allocation10 + $0xb38] sm:$0xff]
    %v796 = vld [vmem:[#allocation10 + $0xb40] sm:$0xff]
    %v797 = vld [vmem:[#allocation10 + $0xb48] sm:$0xff]
    %v798 = vld [vmem:[#allocation10 + $0xb50] sm:$0xff]
    %v799 = vld [vmem:[#allocation10 + $0xb58] sm:$0xff]
    %v800 = vld [vmem:[#allocation10 + $0xb60] sm:$0xff]
    %v801 = vld [vmem:[#allocation10 + $0xb68] sm:$0xff]
    %v802 = vld [vmem:[#allocation10 + $0xb70] sm:$0xff]
    %v803 = vld [vmem:[#allocation10 + $0xb78] sm:$0xff]
    %v804 = vld [vmem:[#allocation10 + $0xb80] sm:$0xff]
    %v805 = vld [vmem:[#allocation10 + $0xb88] sm:$0xff]
    %v806 = vld [vmem:[#allocation10 + $0xb90] sm:$0xff]
    %v807 = vld [vmem:[#allocation10 + $0xb98] sm:$0xff]
    %v808 = vld [vmem:[#allocation10 + $0xba0] sm:$0xff]
    %v809 = vld [vmem:[#allocation10 + $0xba8] sm:$0xff]
    %v810 = vld [vmem:[#allocation10 + $0xbb0] sm:$0xff]
    %v811 = vld [vmem:[#allocation10 + $0xbb8] sm:$0xff]
    %v812 = vld [vmem:[#allocation10 + $0xbc0] sm:$0xff]
    %v813 = vld [vmem:[#allocation10 + $0xbc8] sm:$0xff]
    %v814 = vld [vmem:[#allocation10 + $0xbd0] sm:$0xff]
    %v815 = vld [vmem:[#allocation10 + $0xbd8] sm:$0xff]
    %v816 = vld [vmem:[#allocation10 + $0xbe0] sm:$0xff]
    %v817 = vld [vmem:[#allocation10 + $0xbe8] sm:$0xff]
    %v818 = vld [vmem:[#allocation10 + $0xbf0] sm:$0xff]
    %v819 = vld [vmem:[#allocation10 + $0xbf8] sm:$0xff]
    %820 = vmatprep.subr.mxu0 %v437
    %821 = vmatpush1.msra.mxu0 %v436
    %822 = vmatprep.subr.mxu0 %v443
    %823 = vmatpush1.msra.mxu0 %v442
    %824 = vmatprep.subr.mxu0 %v449
    %825 = vmatpush1.msra.mxu0 %v448
    %826 = vmatprep.subr.mxu0 %v455
    %827 = vmatpush1.msra.mxu0 %v454
    %828 = vmatprep.subr.mxu0 %v461
    %829 = vmatpush1.msra.mxu0 %v460
    %830 = vmatprep.subr.mxu0 %v467
    %831 = vmatpush1.msra.mxu0 %v466
    %832 = vmatprep.subr.mxu0 %v473
    %833 = vmatpush1.msra.mxu0 %v472
    %834 = vmatprep.subr.mxu0 %v479
    %835 = vmatpush1.msra.mxu0 %v478
    %836 = vmatprep.subr.mxu0 %v485
    %837 = vmatpush1.msra.mxu0 %v484
    %838 = vmatprep.subr.mxu0 %v491
    %839 = vmatpush1.msra.mxu0 %v490
    %840 = vmatprep.subr.mxu0 %v497
    %841 = vmatpush1.msra.mxu0 %v496
    %842 = vmatprep.subr.mxu0 %v503
    %843 = vmatpush1.msra.mxu0 %v502
    %844 = vmatprep.subr.mxu0 %v509
    %845 = vmatpush1.msra.mxu0 %v508
    %846 = vmatprep.subr.mxu0 %v515
    %847 = vmatpush1.msra.mxu0 %v514
    %848 = vmatprep.subr.mxu0 %v521
    %849 = vmatpush1.msra.mxu0 %v520
    %850 = vmatprep.subr.mxu0 %v527
    %851 = vmatpush1.msra.mxu0 %v526
    %852 = vmatprep.subr.mxu0 %v533
    %853 = vmatpush1.msra.mxu0 %v532
    %854 = vmatprep.subr.mxu0 %v539
    %855 = vmatpush1.msra.mxu0 %v538
    %856 = vmatprep.subr.mxu0 %v545
    %857 = vmatpush1.msra.mxu0 %v544
    %858 = vmatprep.subr.mxu0 %v551
    %859 = vmatpush1.msra.mxu0 %v550
    %860 = vmatprep.subr.mxu0 %v557
    %861 = vmatpush1.msra.mxu0 %v556
    %862 = vmatprep.subr.mxu0 %v563
    %863 = vmatpush1.msra.mxu0 %v562
    %864 = vmatprep.subr.mxu0 %v569
    %865 = vmatpush1.msra.mxu0 %v568
    %866 = vmatprep.subr.mxu0 %v575
    %867 = vmatpush1.msra.mxu0 %v574
    %868 = vmatprep.subr.mxu0 %v581
    %869 = vmatpush1.msra.mxu0 %v580
    %870 = vmatprep.subr.mxu0 %v587
    %871 = vmatpush1.msra.mxu0 %v586
    %872 = vmatprep.subr.mxu0 %v593
    %873 = vmatpush1.msra.mxu0 %v592
    %874 = vmatprep.subr.mxu0 %v599
    %875 = vmatpush1.msra.mxu0 %v598
    %876 = vmatprep.subr.mxu0 %v605
    %877 = vmatpush1.msra.mxu0 %v604
    %878 = vmatprep.subr.mxu0 %v611
    %879 = vmatpush1.msra.mxu0 %v610
    %880 = vmatprep.subr.mxu0 %v617
    %881 = vmatpush1.msra.mxu0 %v616
    %882 = vmatprep.subr.mxu0 %v623
    %883 = vmatpush1.msra.mxu0 %v622
    %884 = vmatprep.mubr.f32.mxu0 %v414
    %885 = vmatmul.mubr.f32.gmra.mrb[0].mxu0 %v404
    %v886 = vpop.f32.mrb[0].mxu0
    %v887 = vadd.f32 0.0, %v886
    %v888 = vpop.f32.mrb[0].mxu0
    %v889 = vadd.f32 0.0, %v888
    %890 = vdwg.mxu0
    %891 = vmatprep.subr.mxu0 %v629
    %892 = vmatpush1.msra.mxu0 %v628
    %893 = vmatprep.subr.mxu0 %v635
    %894 = vmatpush1.msra.mxu0 %v634
    %895 = vmatprep.subr.mxu0 %v641
    %896 = vmatpush1.msra.mxu0 %v640
    %897 = vmatprep.subr.mxu0 %v647
    %898 = vmatpush1.msra.mxu0 %v646
    %899 = vmatprep.subr.mxu0 %v653
    %900 = vmatpush1.msra.mxu0 %v652
    %901 = vmatprep.subr.mxu0 %v659
    %902 = vmatpush1.msra.mxu0 %v658
    %903 = vmatprep.subr.mxu0 %v665
    %904 = vmatpush1.msra.mxu0 %v664
    %905 = vmatprep.subr.mxu0 %v671
    %906 = vmatpush1.msra.mxu0 %v670
    %907 = vmatprep.subr.mxu0 %v677
    %908 = vmatpush1.msra.mxu0 %v676
    %909 = vmatprep.subr.mxu0 %v683
    %910 = vmatpush1.msra.mxu0 %v682
    %911 = vmatprep.subr.mxu0 %v689
    %912 = vmatpush1.msra.mxu0 %v688
    %913 = vmatprep.subr.mxu0 %v695
    %914 = vmatpush1.msra.mxu0 %v694
    %915 = vmatprep.subr.mxu0 %v701
    %916 = vmatpush1.msra.mxu0 %v700
    %917 = vmatprep.subr.mxu0 %v707
    %918 = vmatpush1.msra.mxu0 %v706
    %919 = vmatprep.subr.mxu0 %v713
    %920 = vmatpush1.msra.mxu0 %v712
    %921 = vmatprep.subr.mxu0 %v719
    %922 = vmatpush1.msra.mxu0 %v718
    %923 = vmatprep.subr.mxu0 %v725
    %924 = vmatpush1.msra.mxu0 %v724
    %925 = vmatprep.subr.mxu0 %v731
    %926 = vmatpush1.msra.mxu0 %v730
    %927 = vmatprep.subr.mxu0 %v737
    %928 = vmatpush1.msra.mxu0 %v736
    %929 = vmatprep.subr.mxu0 %v743
    %930 = vmatpush1.msra.mxu0 %v742
    %931 = vmatprep.subr.mxu0 %v749
    %932 = vmatpush1.msra.mxu0 %v748
    %933 = vmatprep.subr.mxu0 %v755
    %934 = vmatpush1.msra.mxu0 %v754
    %935 = vmatprep.subr.mxu0 %v761
    %936 = vmatpush1.msra.mxu0 %v760
    %937 = vmatprep.subr.mxu0 %v767
    %938 = vmatpush1.msra.mxu0 %v766
    %939 = vmatprep.subr.mxu0 %v773
    %940 = vmatpush1.msra.mxu0 %v772
    %941 = vmatprep.subr.mxu0 %v779
    %942 = vmatpush1.msra.mxu0 %v778
    %943 = vmatprep.subr.mxu0 %v785
    %944 = vmatpush1.msra.mxu0 %v784
    %945 = vmatprep.subr.mxu0 %v791
    %946 = vmatpush1.msra.mxu0 %v790
    %947 = vmatprep.subr.mxu0 %v797
    %948 = vmatpush1.msra.mxu0 %v796
    %949 = vmatprep.subr.mxu0 %v803
    %950 = vmatpush1.msra.mxu0 %v802
    %951 = vmatprep.subr.mxu0 %v809
    %952 = vmatpush1.msra.mxu0 %v808
    %953 = vmatprep.subr.mxu0 %v815
    %954 = vmatpush1.msra.mxu0 %v814
    %955 = vmatprep.mubr.f32.mxu0 %v434
    %956 = vmatmul.mubr.f32.gmra.mrb[0].mxu0 %v424
    %v957 = vpop.f32.mrb[0].mxu0
    %v958 = vadd.f32 %v887, %v957
    %v959 = vpop.f32.mrb[0].mxu0
    %v960 = vadd.f32 %v889, %v959
    %961 = vdwg.mxu0
    %962 = vmatprep.subr.mxu0 %v439
    %963 = vmatpush1.msra.mxu0 %v438
    %964 = vmatprep.subr.mxu0 %v445
    %965 = vmatpush1.msra.mxu0 %v444
    %966 = vmatprep.subr.mxu0 %v451
    %967 = vmatpush1.msra.mxu0 %v450
    %968 = vmatprep.subr.mxu0 %v457
    %969 = vmatpush1.msra.mxu0 %v456
    %970 = vmatprep.subr.mxu0 %v463
    %971 = vmatpush1.msra.mxu0 %v462
    %972 = vmatprep.subr.mxu0 %v469
    %973 = vmatpush1.msra.mxu0 %v468
    %974 = vmatprep.subr.mxu0 %v475
    %975 = vmatpush1.msra.mxu0 %v474
    %976 = vmatprep.subr.mxu0 %v481
    %977 = vmatpush1.msra.mxu0 %v480
    %978 = vmatprep.subr.mxu0 %v487
    %979 = vmatpush1.msra.mxu0 %v486
    %980 = vmatprep.subr.mxu0 %v493
    %981 = vmatpush1.msra.mxu0 %v492
    %982 = vmatprep.subr.mxu0 %v499
    %983 = vmatpush1.msra.mxu0 %v498
    %984 = vmatprep.subr.mxu0 %v505
    %985 = vmatpush1.msra.mxu0 %v504
    %986 = vmatprep.subr.mxu0 %v511
    %987 = vmatpush1.msra.mxu0 %v510
    %988 = vmatprep.subr.mxu0 %v517
    %989 = vmatpush1.msra.mxu0 %v516
    %990 = vmatprep.subr.mxu0 %v523
    %991 = vmatpush1.msra.mxu0 %v522
    %992 = vmatprep.subr.mxu0 %v529
    %993 = vmatpush1.msra.mxu0 %v528
    %994 = vmatprep.subr.mxu0 %v535
    %995 = vmatpush1.msra.mxu0 %v534
    %996 = vmatprep.subr.mxu0 %v541
    %997 = vmatpush1.msra.mxu0 %v540
    %998 = vmatprep.subr.mxu0 %v547
    %999 = vmatpush1.msra.mxu0 %v546
    %1000 = vmatprep.subr.mxu0 %v553
    %1001 = vmatpush1.msra.mxu0 %v552
    %1002 = vmatprep.subr.mxu0 %v559
    %1003 = vmatpush1.msra.mxu0 %v558
    %1004 = vmatprep.subr.mxu0 %v565
    %1005 = vmatpush1.msra.mxu0 %v564
    %1006 = vmatprep.subr.mxu0 %v571
    %1007 = vmatpush1.msra.mxu0 %v570
    %1008 = vmatprep.subr.mxu0 %v577
    %1009 = vmatpush1.msra.mxu0 %v576
    %1010 = vmatprep.subr.mxu0 %v583
    %1011 = vmatpush1.msra.mxu0 %v582
    %1012 = vmatprep.subr.mxu0 %v589
    %1013 = vmatpush1.msra.mxu0 %v588
    %1014 = vmatprep.subr.mxu0 %v595
    %1015 = vmatpush1.msra.mxu0 %v594
    %1016 = vmatprep.subr.mxu0 %v601
    %1017 = vmatpush1.msra.mxu0 %v600
    %1018 = vmatprep.subr.mxu0 %v607
    %1019 = vmatpush1.msra.mxu0 %v606
    %1020 = vmatprep.subr.mxu0 %v613
    %1021 = vmatpush1.msra.mxu0 %v612
    %1022 = vmatprep.subr.mxu0 %v619
    %1023 = vmatpush1.msra.mxu0 %v618
    %1024 = vmatprep.subr.mxu0 %v625
    %1025 = vmatpush1.msra.mxu0 %v624
    %1026 = vmatprep.mubr.f32.mxu0 %v414
    %1027 = vmatmul.mubr.f32.gmra.mrb[0].mxu0 %v404
    %v1028 = vpop.f32.mrb[0].mxu0
    %v1029 = vadd.f32 0.0, %v1028
    %v1030 = vpop.f32.mrb[0].mxu0
    %v1031 = vadd.f32 0.0, %v1030
    %1032 = vdwg.mxu0
    %1033 = vmatprep.subr.mxu0 %v631
    %1034 = vmatpush1.msra.mxu0 %v630
    %1035 = vmatprep.subr.mxu0 %v637
    %1036 = vmatpush1.msra.mxu0 %v636
    %1037 = vmatprep.subr.mxu0 %v643
    %1038 = vmatpush1.msra.mxu0 %v642
    %1039 = vmatprep.subr.mxu0 %v649
    %1040 = vmatpush1.msra.mxu0 %v648
    %1041 = vmatprep.subr.mxu0 %v655
    %1042 = vmatpush1.msra.mxu0 %v654
    %1043 = vmatprep.subr.mxu0 %v661
    %1044 = vmatpush1.msra.mxu0 %v660
    %1045 = vmatprep.subr.mxu0 %v667
    %1046 = vmatpush1.msra.mxu0 %v666
    %1047 = vmatprep.subr.mxu0 %v673
    %1048 = vmatpush1.msra.mxu0 %v672
    %1049 = vmatprep.subr.mxu0 %v679
    %1050 = vmatpush1.msra.mxu0 %v678
    %1051 = vmatprep.subr.mxu0 %v685
    %1052 = vmatpush1.msra.mxu0 %v684
    %1053 = vmatprep.subr.mxu0 %v691
    %1054 = vmatpush1.msra.mxu0 %v690
    %1055 = vmatprep.subr.mxu0 %v697
    %1056 = vmatpush1.msra.mxu0 %v696
    %1057 = vmatprep.subr.mxu0 %v703
    %1058 = vmatpush1.msra.mxu0 %v702
    %1059 = vmatprep.subr.mxu0 %v709
    %1060 = vmatpush1.msra.mxu0 %v708
    %1061 = vmatprep.subr.mxu0 %v715
    %1062 = vmatpush1.msra.mxu0 %v714
    %1063 = vmatprep.subr.mxu0 %v721
    %1064 = vmatpush1.msra.mxu0 %v720
    %1065 = vmatprep.subr.mxu0 %v727
    %1066 = vmatpush1.msra.mxu0 %v726
    %1067 = vmatprep.subr.mxu0 %v733
    %1068 = vmatpush1.msra.mxu0 %v732
    %1069 = vmatprep.subr.mxu0 %v739
    %1070 = vmatpush1.msra.mxu0 %v738
    %1071 = vmatprep.subr.mxu0 %v745
    %1072 = vmatpush1.msra.mxu0 %v744
    %1073 = vmatprep.subr.mxu0 %v751
    %1074 = vmatpush1.msra.mxu0 %v750
    %1075 = vmatprep.subr.mxu0 %v757
    %1076 = vmatpush1.msra.mxu0 %v756
    %1077 = vmatprep.subr.mxu0 %v763
    %1078 = vmatpush1.msra.mxu0 %v762
    %1079 = vmatprep.subr.mxu0 %v769
    %1080 = vmatpush1.msra.mxu0 %v768
    %1081 = vmatprep.subr.mxu0 %v775
    %1082 = vmatpush1.msra.mxu0 %v774
    %1083 = vmatprep.subr.mxu0 %v781
    %1084 = vmatpush1.msra.mxu0 %v780
    %1085 = vmatprep.subr.mxu0 %v787
    %1086 = vmatpush1.msra.mxu0 %v786
    %1087 = vmatprep.subr.mxu0 %v793
    %1088 = vmatpush1.msra.mxu0 %v792
    %1089 = vmatprep.subr.mxu0 %v799
    %1090 = vmatpush1.msra.mxu0 %v798
    %1091 = vmatprep.subr.mxu0 %v805
    %1092 = vmatpush1.msra.mxu0 %v804
    %1093 = vmatprep.subr.mxu0 %v811
    %1094 = vmatpush1.msra.mxu0 %v810
    %1095 = vmatprep.subr.mxu0 %v817
    %1096 = vmatpush1.msra.mxu0 %v816
    %1097 = vmatprep.mubr.f32.mxu0 %v434
    %1098 = vmatmul.mubr.f32.gmra.mrb[0].mxu0 %v424
    %v1099 = vpop.f32.mrb[0].mxu0
    %v1100 = vadd.f32 %v1029, %v1099
    %v1101 = vpop.f32.mrb[0].mxu0
    %v1102 = vadd.f32 %v1031, %v1101
    %1103 = vdwg.mxu0
    %1104 = vmatprep.subr.mxu0 %v441
    %1105 = vmatpush1.msra.mxu0 %v440
    %1106 = vmatprep.subr.mxu0 %v447
    %1107 = vmatpush1.msra.mxu0 %v446
    %1108 = vmatprep.subr.mxu0 %v453
    %1109 = vmatpush1.msra.mxu0 %v452
    %1110 = vmatprep.subr.mxu0 %v459
    %1111 = vmatpush1.msra.mxu0 %v458
    %1112 = vmatprep.subr.mxu0 %v465
    %1113 = vmatpush1.msra.mxu0 %v464
    %1114 = vmatprep.subr.mxu0 %v471
    %1115 = vmatpush1.msra.mxu0 %v470
    %1116 = vmatprep.subr.mxu0 %v477
    %1117 = vmatpush1.msra.mxu0 %v476
    %1118 = vmatprep.subr.mxu0 %v483
    %1119 = vmatpush1.msra.mxu0 %v482
    %1120 = vmatprep.subr.mxu0 %v489
    %1121 = vmatpush1.msra.mxu0 %v488
    %1122 = vmatprep.subr.mxu0 %v495
    %1123 = vmatpush1.msra.mxu0 %v494
    %1124 = vmatprep.subr.mxu0 %v501
    %1125 = vmatpush1.msra.mxu0 %v500
    %1126 = vmatprep.subr.mxu0 %v507
    %1127 = vmatpush1.msra.mxu0 %v506
    %1128 = vmatprep.subr.mxu0 %v513
    %1129 = vmatpush1.msra.mxu0 %v512
    %1130 = vmatprep.subr.mxu0 %v519
    %1131 = vmatpush1.msra.mxu0 %v518
    %1132 = vmatprep.subr.mxu0 %v525
    %1133 = vmatpush1.msra.mxu0 %v524
    %1134 = vmatprep.subr.mxu0 %v531
    %1135 = vmatpush1.msra.mxu0 %v530
    %1136 = vmatprep.subr.mxu0 %v537
    %1137 = vmatpush1.msra.mxu0 %v536
    %1138 = vmatprep.subr.mxu0 %v543
    %1139 = vmatpush1.msra.mxu0 %v542
    %1140 = vmatprep.subr.mxu0 %v549
    %1141 = vmatpush1.msra.mxu0 %v548
    %1142 = vmatprep.subr.mxu0 %v555
    %1143 = vmatpush1.msra.mxu0 %v554
    %1144 = vmatprep.subr.mxu0 %v561
    %1145 = vmatpush1.msra.mxu0 %v560
    %1146 = vmatprep.subr.mxu0 %v567
    %1147 = vmatpush1.msra.mxu0 %v566
    %1148 = vmatprep.subr.mxu0 %v573
    %1149 = vmatpush1.msra.mxu0 %v572
    %1150 = vmatprep.subr.mxu0 %v579
    %1151 = vmatpush1.msra.mxu0 %v578
    %1152 = vmatprep.subr.mxu0 %v585
    %1153 = vmatpush1.msra.mxu0 %v584
    %1154 = vmatprep.subr.mxu0 %v591
    %1155 = vmatpush1.msra.mxu0 %v590
    %1156 = vmatprep.subr.mxu0 %v597
    %1157 = vmatpush1.msra.mxu0 %v596
    %1158 = vmatprep.subr.mxu0 %v603
    %1159 = vmatpush1.msra.mxu0 %v602
    %1160 = vmatprep.subr.mxu0 %v609
    %1161 = vmatpush1.msra.mxu0 %v608
    %1162 = vmatprep.subr.mxu0 %v615
    %1163 = vmatpush1.msra.mxu0 %v614
    %1164 = vmatprep.subr.mxu0 %v621
    %1165 = vmatpush1.msra.mxu0 %v620
    %1166 = vmatprep.subr.mxu0 %v627
    %1167 = vmatpush1.msra.mxu0 %v626
    %1168 = vmatprep.mubr.f32.mxu0 %v414
    %1169 = vmatmul.mubr.f32.gmra.mrb[0].mxu0 %v404
    %v1170 = vpop.f32.mrb[0].mxu0
    %v1171 = vadd.f32 0.0, %v1170
    %v1172 = vpop.f32.mrb[0].mxu0
    %v1173 = vadd.f32 0.0, %v1172
    %1174 = vdwg.mxu0
    %1175 = vmatprep.subr.mxu0 %v633
    %1176 = vmatpush1.msra.mxu0 %v632
    %1177 = vmatprep.subr.mxu0 %v639
    %1178 = vmatpush1.msra.mxu0 %v638
    %1179 = vmatprep.subr.mxu0 %v645
    %1180 = vmatpush1.msra.mxu0 %v644
    %1181 = vmatprep.subr.mxu0 %v651
    %1182 = vmatpush1.msra.mxu0 %v650
    %1183 = vmatprep.subr.mxu0 %v657
    %1184 = vmatpush1.msra.mxu0 %v656
    %1185 = vmatprep.subr.mxu0 %v663
    %1186 = vmatpush1.msra.mxu0 %v662
    %1187 = vmatprep.subr.mxu0 %v669
    %1188 = vmatpush1.msra.mxu0 %v668
    %1189 = vmatprep.subr.mxu0 %v675
    %1190 = vmatpush1.msra.mxu0 %v674
    %1191 = vmatprep.subr.mxu0 %v681
    %1192 = vmatpush1.msra.mxu0 %v680
    %1193 = vmatprep.subr.mxu0 %v687
    %1194 = vmatpush1.msra.mxu0 %v686
    %1195 = vmatprep.subr.mxu0 %v693
    %1196 = vmatpush1.msra.mxu0 %v692
    %1197 = vmatprep.subr.mxu0 %v699
    %1198 = vmatpush1.msra.mxu0 %v698
    %1199 = vmatprep.subr.mxu0 %v705
    %1200 = vmatpush1.msra.mxu0 %v704
    %1201 = vmatprep.subr.mxu0 %v711
    %1202 = vmatpush1.msra.mxu0 %v710
    %1203 = vmatprep.subr.mxu0 %v717
    %1204 = vmatpush1.msra.mxu0 %v716
    %1205 = vmatprep.subr.mxu0 %v723
    %1206 = vmatpush1.msra.mxu0 %v722
    %1207 = vmatprep.subr.mxu0 %v729
    %1208 = vmatpush1.msra.mxu0 %v728
    %1209 = vmatprep.subr.mxu0 %v735
    %1210 = vmatpush1.msra.mxu0 %v734
    %1211 = vmatprep.subr.mxu0 %v741
    %1212 = vmatpush1.msra.mxu0 %v740
    %1213 = vmatprep.subr.mxu0 %v747
    %1214 = vmatpush1.msra.mxu0 %v746
    %1215 = vmatprep.subr.mxu0 %v753
    %1216 = vmatpush1.msra.mxu0 %v752
    %1217 = vmatprep.subr.mxu0 %v759
    %1218 = vmatpush1.msra.mxu0 %v758
    %1219 = vmatprep.subr.mxu0 %v765
    %1220 = vmatpush1.msra.mxu0 %v764
    %1221 = vmatprep.subr.mxu0 %v771
    %1222 = vmatpush1.msra.mxu0 %v770
    %1223 = vmatprep.subr.mxu0 %v777
    %1224 = vmatpush1.msra.mxu0 %v776
    %1225 = vmatprep.subr.mxu0 %v783
    %1226 = vmatpush1.msra.mxu0 %v782
    %1227 = vmatprep.subr.mxu0 %v789
    %1228 = vmatpush1.msra.mxu0 %v788
    %1229 = vmatprep.subr.mxu0 %v795
    %1230 = vmatpush1.msra.mxu0 %v794
    %1231 = vmatprep.subr.mxu0 %v801
    %1232 = vmatpush1.msra.mxu0 %v800
    %1233 = vmatprep.subr.mxu0 %v807
    %1234 = vmatpush1.msra.mxu0 %v806
    %1235 = vmatprep.subr.mxu0 %v813
    %1236 = vmatpush1.msra.mxu0 %v812
    %1237 = vmatprep.subr.mxu0 %v819
    %1238 = vmatpush1.msra.mxu0 %v818
    %1239 = vmatprep.mubr.f32.mxu0 %v434
    %1240 = vmatmul.mubr.f32.gmra.mrb[0].mxu0 %v424
    %v1241 = vpop.f32.mrb[0].mxu0
    %v1242 = vadd.f32 %v1171, %v1241
    %v1243 = vpop.f32.mrb[0].mxu0
    %v1244 = vadd.f32 %v1173, %v1243
    %1245 = vdwg.mxu0
    %v1246 = vsel %vm260, %v958, 0.0
    %v1247 = vrot.slane %v1246, 4
    %v1248 = vadd.f32 %v1246, %v1247
    %v1249 = vrot.slane %v1248, 2
    %v1250 = vadd.f32 %v1248, %v1249
    %v1251 = vrot.slane %v1250, 1
    %v1252 = vadd.f32 %v1250, %v1251
    %v1253 = vsel %vm260, %v960, 0.0
    %v1254 = vrot.slane %v1253, 4
    %v1255 = vadd.f32 %v1253, %v1254
    %v1256 = vrot.slane %v1255, 2
    %v1257 = vadd.f32 %v1255, %v1256
    %v1258 = vrot.slane %v1257, 1
    %v1259 = vadd.f32 %v1257, %v1258
    %v1260 = vsel %vm260, %v1100, 0.0
    %v1261 = vrot.slane %v1260, 4
    %v1262 = vadd.f32 %v1260, %v1261
    %v1263 = vrot.slane %v1262, 2
    %v1264 = vadd.f32 %v1262, %v1263
    %v1265 = vrot.slane %v1264, 1
    %v1266 = vadd.f32 %v1264, %v1265
    %v1267 = vsel %vm260, %v1102, 0.0
    %v1268 = vrot.slane %v1267, 4
    %v1269 = vadd.f32 %v1267, %v1268
    %v1270 = vrot.slane %v1269, 2
    %v1271 = vadd.f32 %v1269, %v1270
    %v1272 = vrot.slane %v1271, 1
    %v1273 = vadd.f32 %v1271, %v1272
    %v1274 = vsel %vm260, %v1242, 0.0
    %v1275 = vrot.slane %v1274, 4
    %v1276 = vadd.f32 %v1274, %v1275
    %v1277 = vrot.slane %v1276, 2
    %v1278 = vadd.f32 %v1276, %v1277
    %v1279 = vrot.slane %v1278, 1
    %v1280 = vadd.f32 %v1278, %v1279
    %v1281 = vsel %vm260, %v1244, 0.0
    %v1282 = vrot.slane %v1281, 4
    %v1283 = vadd.f32 %v1281, %v1282
    %v1284 = vrot.slane %v1283, 2
    %v1285 = vadd.f32 %v1283, %v1284
    %v1286 = vrot.slane %v1285, 1
    %v1287 = vadd.f32 %v1285, %v1286
    %v1288 = vrcp.pop 2.0
    %v1289 = vmul.f32 %v1252, %v1288
    %v1290 = vmul.f32 %v1259, %v1288
    %v1291 = vmul.f32 %v1266, %v1288
    %v1292 = vmul.f32 %v1273, %v1288
    %v1293 = vmul.f32 %v1280, %v1288
    %v1294 = vmul.f32 %v1287, %v1288
    %v1295 = vsub.f32 %v958, %v1289
    %v1296 = vsub.f32 %v960, %v1290
    %v1297 = vsub.f32 %v1100, %v1291
    %v1298 = vsub.f32 %v1102, %v1292
    %v1299 = vsub.f32 %v1242, %v1293
    %v1300 = vsub.f32 %v1244, %v1294
    %v1301 = vmul.f32 %v1295, %v1295
    %v1302 = vmul.f32 %v1296, %v1296
    %v1303 = vmul.f32 %v1297, %v1297
    %v1304 = vmul.f32 %v1298, %v1298
    %v1305 = vmul.f32 %v1299, %v1299
    %v1306 = vmul.f32 %v1300, %v1300
    %v1307 = vsel %vm260, %v1301, 0.0
    %v1308 = vrot.slane %v1307, 4
    %v1309 = vadd.f32 %v1307, %v1308
    %v1310 = vrot.slane %v1309, 2
    %v1311 = vadd.f32 %v1309, %v1310
    %v1312 = vrot.slane %v1311, 1
    %v1313 = vadd.f32 %v1311, %v1312
    %v1314 = vsel %vm260, %v1302, 0.0
    %v1315 = vrot.slane %v1314, 4
    %v1316 = vadd.f32 %v1314, %v1315
    %v1317 = vrot.slane %v1316, 2
    %v1318 = vadd.f32 %v1316, %v1317
    %v1319 = vrot.slane %v1318, 1
    %v1320 = vadd.f32 %v1318, %v1319
    %v1321 = vsel %vm260, %v1303, 0.0
    %v1322 = vrot.slane %v1321, 4
    %v1323 = vadd.f32 %v1321, %v1322
    %v1324 = vrot.slane %v1323, 2
    %v1325 = vadd.f32 %v1323, %v1324
    %v1326 = vrot.slane %v1325, 1
    %v1327 = vadd.f32 %v1325, %v1326
    %v1328 = vsel %vm260, %v1304, 0.0
    %v1329 = vrot.slane %v1328, 4
    %v1330 = vadd.f32 %v1328, %v1329
    %v1331 = vrot.slane %v1330, 2
    %v1332 = vadd.f32 %v1330, %v1331
    %v1333 = vrot.slane %v1332, 1
    %v1334 = vadd.f32 %v1332, %v1333
    %v1335 = vsel %vm260, %v1305, 0.0
    %v1336 = vrot.slane %v1335, 4
    %v1337 = vadd.f32 %v1335, %v1336
    %v1338 = vrot.slane %v1337, 2
    %v1339 = vadd.f32 %v1337, %v1338
    %v1340 = vrot.slane %v1339, 1
    %v1341 = vadd.f32 %v1339, %v1340
    %v1342 = vsel %vm260, %v1306, 0.0
    %v1343 = vrot.slane %v1342, 4
    %v1344 = vadd.f32 %v1342, %v1343
    %v1345 = vrot.slane %v1344, 2
    %v1346 = vadd.f32 %v1344, %v1345
    %v1347 = vrot.slane %v1346, 1
    %v1348 = vadd.f32 %v1346, %v1347
    %v1349 = vmul.f32 %v1313, %v1288
    %v1350 = vmul.f32 %v1320, %v1288
    %v1351 = vmul.f32 %v1327, %v1288
    %v1352 = vmul.f32 %v1334, %v1288
    %v1353 = vmul.f32 %v1341, %v1288
    %v1354 = vmul.f32 %v1348, %v1288
    %v1355 = vadd.f32 %v1349, 1e-05
    %v1356 = vadd.f32 %v1350, 1e-05
    %v1357 = vadd.f32 %v1351, 1e-05
    %v1358 = vadd.f32 %v1352, 1e-05
    %v1359 = vadd.f32 %v1353, 1e-05
    %v1360 = vadd.f32 %v1354, 1e-05
    %v1361 = vrsqrt.pop %v1355
    %v1362 = vrsqrt.pop %v1356
    %v1363 = vrsqrt.pop %v1357
    %v1364 = vrsqrt.pop %v1358
    %v1365 = vrsqrt.pop %v1359
    %v1366 = vrsqrt.pop %v1360
    %v1367 = vmul.f32 %v1295, %v1361
    %v1368 = vmul.f32 %v1296, %v1362
    %v1369 = vmul.f32 %v1297, %v1363
    %v1370 = vmul.f32 %v1298, %v1364
    %v1371 = vmul.f32 %v1299, %v1365
    %v1372 = vmul.f32 %v1300, %v1366
    %v1373 = vld [vmem:[#allocation11] sm:$0x3f]
    %v1375 = vlaneseq
    %v1376 = vshrl.u32 %v1375, 7
    %v1377 = vsub.s32 0, %v1376
    %v1378 = vrot.slane %v1373, %v1377
    %v1379 = vlaneseq
    %v1380 = vshrl.u32 %v1379, 7
    %v1381 = vsub.s32 1, %v1380
    %v1382 = vrot.slane %v1373, %v1381
    %v1383 = vlaneseq
    %v1384 = vshrl.u32 %v1383, 7
    %v1385 = vsub.s32 2, %v1384
    %v1386 = vrot.slane %v1373, %v1385
    %v1387 = vlaneseq
    %v1388 = vshrl.u32 %v1387, 7
    %v1389 = vsub.s32 3, %v1388
    %v1390 = vrot.slane %v1373, %v1389
    %v1391 = vlaneseq
    %v1392 = vshrl.u32 %v1391, 7
    %v1393 = vsub.s32 4, %v1392
    %v1394 = vrot.slane %v1373, %v1393
    %v1395 = vlaneseq
    %v1396 = vshrl.u32 %v1395, 7
    %v1397 = vsub.s32 5, %v1396
    %v1398 = vrot.slane %v1373, %v1397
    %v1405 = vmul.f32 %v1367, %v1378
    %v1406 = vmul.f32 %v1368, %v1382
    %v1407 = vmul.f32 %v1369, %v1386
    %v1408 = vmul.f32 %v1370, %v1390
    %v1409 = vmul.f32 %v1371, %v1394
    %v1410 = vmul.f32 %v1372, %v1398
    %v1411 = vld [vmem:[#allocation13] sm:$0x3f]
    %v1413 = vlaneseq
    %v1414 = vshrl.u32 %v1413, 7
    %v1415 = vsub.s32 0, %v1414
    %v1416 = vrot.slane %v1411, %v1415
    %v1417 = vlaneseq
    %v1418 = vshrl.u32 %v1417, 7
    %v1419 = vsub.s32 1, %v1418
    %v1420 = vrot.slane %v1411, %v1419
    %v1421 = vlaneseq
    %v1422 = vshrl.u32 %v1421, 7
    %v1423 = vsub.s32 2, %v1422
    %v1424 = vrot.slane %v1411, %v1423
    %v1425 = vlaneseq
    %v1426 = vshrl.u32 %v1425, 7
    %v1427 = vsub.s32 3, %v1426
    %v1428 = vrot.slane %v1411, %v1427
    %v1429 = vlaneseq
    %v1430 = vshrl.u32 %v1429, 7
    %v1431 = vsub.s32 4, %v1430
    %v1432 = vrot.slane %v1411, %v1431
    %v1433 = vlaneseq
    %v1434 = vshrl.u32 %v1433, 7
    %v1435 = vsub.s32 5, %v1434
    %v1436 = vrot.slane %v1411, %v1435
    %v1443 = vadd.f32 %v1405, %v1416
    %v1444 = vadd.f32 %v1406, %v1420
    %v1445 = vadd.f32 %v1407, %v1424
    %v1446 = vadd.f32 %v1408, %v1428
    %v1447 = vadd.f32 %v1409, %v1432
    %v1448 = vadd.f32 %v1410, %v1436
    %v1449 = vmax.f32 %v1443, 0.0
    %v1450 = vmax.f32 %v1444, 0.0
    %v1451 = vmax.f32 %v1445, 0.0
    %v1452 = vmax.f32 %v1446, 0.0
    %v1453 = vmax.f32 %v1447, 0.0
    %v1454 = vmax.f32 %v1448, 0.0
    %v1455 = vld [vmem:[#allocation14] sm:$0xff]
    %v1456 = vld [vmem:[#allocation14 + $0x8] sm:$0xff]
    %v1457 = vld [vmem:[#allocation14 + $0x10] sm:$0xff]
    %v1458 = vld [vmem:[#allocation14 + $0x18] sm:$0xff]
    %v1459 = vld [vmem:[#allocation14 + $0x20] sm:$0xff]
    %v1460 = vld [vmem:[#allocation14 + $0x28] sm:$0xff]
    %v1461 = vld [vmem:[#allocation14 + $0x30] sm:$0xff]
    %v1462 = vld [vmem:[#allocation14 + $0x38] sm:$0xff]
    %v1463 = vld [vmem:[#allocation14 + $0x40] sm:$0xff]
    %v1464 = vld [vmem:[#allocation14 + $0x48] sm:$0xff]
    %v1465 = vld [vmem:[#allocation14 + $0x50] sm:$0xff]
    %v1466 = vld [vmem:[#allocation14 + $0x58] sm:$0xff]
    %v1467 = vld [vmem:[#allocation14 + $0x60] sm:$0xff]
    %v1468 = vld [vmem:[#allocation14 + $0x68] sm:$0xff]
    %v1469 = vld [vmem:[#allocation14 + $0x70] sm:$0xff]
    %v1470 = vld [vmem:[#allocation14 + $0x78] sm:$0xff]
    %v1471 = vld [vmem:[#allocation14 + $0x80] sm:$0xff]
    %v1472 = vld [vmem:[#allocation14 + $0x88] sm:$0xff]
    %v1473 = vld [vmem:[#allocation14 + $0x90] sm:$0xff]
    %v1474 = vld [vmem:[#allocation14 + $0x98] sm:$0xff]
    %v1475 = vld [vmem:[#allocation14 + $0xa0] sm:$0xff]
    %v1476 = vld [vmem:[#allocation14 + $0xa8] sm:$0xff]
    %v1477 = vld [vmem:[#allocation14 + $0xb0] sm:$0xff]
    %v1478 = vld [vmem:[#allocation14 + $0xb8] sm:$0xff]
    %v1479 = vld [vmem:[#allocation14 + $0xc0] sm:$0xff]
    %v1480 = vld [vmem:[#allocation14 + $0xc8] sm:$0xff]
    %v1481 = vld [vmem:[#allocation14 + $0xd0] sm:$0xff]
    %v1482 = vld [vmem:[#allocation14 + $0xd8] sm:$0xff]
    %v1483 = vld [vmem:[#allocation14 + $0xe0] sm:$0xff]
    %v1484 = vld [vmem:[#allocation14 + $0xe8] sm:$0xff]
    %v1485 = vld [vmem:[#allocation14 + $0xf0] sm:$0xff]
    %v1486 = vld [vmem:[#allocation14 + $0xf8] sm:$0xff]
    %v1487 = vld [vmem:[#allocation14 + $0x100] sm:$0xff]
    %v1488 = vld [vmem:[#allocation14 + $0x108] sm:$0xff]
    %v1489 = vld [vmem:[#allocation14 + $0x110] sm:$0xff]
    %v1490 = vld [vmem:[#allocation14 + $0x118] sm:$0xff]
    %v1491 = vld [vmem:[#allocation14 + $0x120] sm:$0xff]
    %v1492 = vld [vmem:[#allocation14 + $0x128] sm:$0xff]
    %v1493 = vld [vmem:[#allocation14 + $0x130] sm:$0xff]
    %v1494 = vld [vmem:[#allocation14 + $0x138] sm:$0xff]
    %v1495 = vld [vmem:[#allocation14 + $0x140] sm:$0xff]
    %v1496 = vld [vmem:[#allocation14 + $0x148] sm:$0xff]
    %v1497 = vld [vmem:[#allocation14 + $0x150] sm:$0xff]
    %v1498 = vld [vmem:[#allocation14 + $0x158] sm:$0xff]
    %v1499 = vld [vmem:[#allocation14 + $0x160] sm:$0xff]
    %v1500 = vld [vmem:[#allocation14 + $0x168] sm:$0xff]
    %v1501 = vld [vmem:[#allocation14 + $0x170] sm:$0xff]
    %v1502 = vld [vmem:[#allocation14 + $0x178] sm:$0xff]
    %v1503 = vld [vmem:[#allocation14 + $0x180] sm:$0xff]
    %v1504 = vld [vmem:[#allocation14 + $0x188] sm:$0xff]
    %v1505 = vld [vmem:[#allocation14 + $0x190] sm:$0xff]
    %v1506 = vld [vmem:[#allocation14 + $0x198] sm:$0xff]
    %v1507 = vld [vmem:[#allocation14 + $0x1a0] sm:$0xff]
    %v1508 = vld [vmem:[#allocation14 + $0x1a8] sm:$0xff]
    %v1509 = vld [vmem:[#allocation14 + $0x1b0] sm:$0xff]
    %v1510 = vld [vmem:[#allocation14 + $0x1b8] sm:$0xff]
    %v1511 = vld [vmem:[#allocation14 + $0x1c0] sm:$0xff]
    %v1512 = vld [vmem:[#allocation14 + $0x1c8] sm:$0xff]
    %v1513 = vld [vmem:[#allocation14 + $0x1d0] sm:$0xff]
    %v1514 = vld [vmem:[#allocation14 + $0x1d8] sm:$0xff]
    %v1515 = vld [vmem:[#allocation14 + $0x1e0] sm:$0xff]
    %v1516 = vld [vmem:[#allocation14 + $0x1e8] sm:$0xff]
    %v1517 = vld [vmem:[#allocation14 + $0x1f0] sm:$0xff]
    %v1518 = vld [vmem:[#allocation14 + $0x1f8] sm:$0xff]
    %v1519 = vld [vmem:[#allocation14 + $0x200] sm:$0xff]
    %v1520 = vld [vmem:[#allocation14 + $0x208] sm:$0xff]
    %v1521 = vld [vmem:[#allocation14 + $0x210] sm:$0xff]
    %v1522 = vld [vmem:[#allocation14 + $0x218] sm:$0xff]
    %v1523 = vld [vmem:[#allocation14 + $0x220] sm:$0xff]
    %v1524 = vld [vmem:[#allocation14 + $0x228] sm:$0xff]
    %v1525 = vld [vmem:[#allocation14 + $0x230] sm:$0xff]
    %v1526 = vld [vmem:[#allocation14 + $0x238] sm:$0xff]
    %v1527 = vld [vmem:[#allocation14 + $0x240] sm:$0xff]
    %v1528 = vld [vmem:[#allocation14 + $0x248] sm:$0xff]
    %v1529 = vld [vmem:[#allocation14 + $0x250] sm:$0xff]
    %v1530 = vld [vmem:[#allocation14 + $0x258] sm:$0xff]
    %v1531 = vld [vmem:[#allocation14 + $0x260] sm:$0xff]
    %v1532 = vld [vmem:[#allocation14 + $0x268] sm:$0xff]
    %v1533 = vld [vmem:[#allocation14 + $0x270] sm:$0xff]
    %v1534 = vld [vmem:[#allocation14 + $0x278] sm:$0xff]
    %v1535 = vld [vmem:[#allocation14 + $0x280] sm:$0xff]
    %v1536 = vld [vmem:[#allocation14 + $0x288] sm:$0xff]
    %v1537 = vld [vmem:[#allocation14 + $0x290] sm:$0xff]
    %v1538 = vld [vmem:[#allocation14 + $0x298] sm:$0xff]
    %v1539 = vld [vmem:[#allocation14 + $0x2a0] sm:$0xff]
    %v1540 = vld [vmem:[#allocation14 + $0x2a8] sm:$0xff]
    %v1541 = vld [vmem:[#allocation14 + $0x2b0] sm:$0xff]
    %v1542 = vld [vmem:[#allocation14 + $0x2b8] sm:$0xff]
    %v1543 = vld [vmem:[#allocation14 + $0x2c0] sm:$0xff]
    %v1544 = vld [vmem:[#allocation14 + $0x2c8] sm:$0xff]
    %v1545 = vld [vmem:[#allocation14 + $0x2d0] sm:$0xff]
    %v1546 = vld [vmem:[#allocation14 + $0x2d8] sm:$0xff]
    %v1547 = vld [vmem:[#allocation14 + $0x2e0] sm:$0xff]
    %v1548 = vld [vmem:[#allocation14 + $0x2e8] sm:$0xff]
    %v1549 = vld [vmem:[#allocation14 + $0x2f0] sm:$0xff]
    %v1550 = vld [vmem:[#allocation14 + $0x2f8] sm:$0xff]
    %v1551 = vld [vmem:[#allocation16] sm:$0x1]
    %v1553 = vlaneseq
    %v1554 = vshrl.u32 %v1553, 7
    %v1555 = vsub.s32 0, %v1554
    %v1556 = vrot.slane %v1551, %v1555
    %1558 = vmatprep.subr.mxu0 0.0
    %1559 = vmatpush1.msra.mxu0 %v1455
    %1560 = vmatprep.subr.mxu0 0.0
    %1561 = vmatpush1.msra.mxu0 %v1456
    %1562 = vmatprep.subr.mxu0 0.0
    %1563 = vmatpush1.msra.mxu0 %v1457
    %1564 = vmatprep.subr.mxu0 0.0
    %1565 = vmatpush1.msra.mxu0 %v1458
    %1566 = vmatprep.subr.mxu0 0.0
    %1567 = vmatpush1.msra.mxu0 %v1459
    %1568 = vmatprep.subr.mxu0 0.0
    %1569 = vmatpush1.msra.mxu0 %v1460
    %1570 = vmatprep.subr.mxu0 0.0
    %1571 = vmatpush1.msra.mxu0 %v1461
    %1572 = vmatprep.subr.mxu0 0.0
    %1573 = vmatpush1.msra.mxu0 %v1462
    %1574 = vmatprep.subr.mxu0 0.0
    %1575 = vmatpush1.msra.mxu0 %v1463
    %1576 = vmatprep.subr.mxu0 0.0
    %1577 = vmatpush1.msra.mxu0 %v1464
    %1578 = vmatprep.subr.mxu0 0.0
    %1579 = vmatpush1.msra.mxu0 %v1465
    %1580 = vmatprep.subr.mxu0 0.0
    %1581 = vmatpush1.msra.mxu0 %v1466
    %1582 = vmatprep.subr.mxu0 0.0
    %1583 = vmatpush1.msra.mxu0 %v1467
    %1584 = vmatprep.subr.mxu0 0.0
    %1585 = vmatpush1.msra.mxu0 %v1468
    %1586 = vmatprep.subr.mxu0 0.0
    %1587 = vmatpush1.msra.mxu0 %v1469
    %1588 = vmatprep.subr.mxu0 0.0
    %1589 = vmatpush1.msra.mxu0 %v1470
    %1590 = vmatprep.subr.mxu0 0.0
    %1591 = vmatpush1.msra.mxu0 %v1471
    %1592 = vmatprep.subr.mxu0 0.0
    %1593 = vmatpush1.msra.mxu0 %v1472
    %1594 = vmatprep.subr.mxu0 0.0
    %1595 = vmatpush1.msra.mxu0 %v1473
    %1596 = vmatprep.subr.mxu0 0.0
    %1597 = vmatpush1.msra.mxu0 %v1474
    %1598 = vmatprep.subr.mxu0 0.0
    %1599 = vmatpush1.msra.mxu0 %v1475
    %1600 = vmatprep.subr.mxu0 0.0
    %1601 = vmatpush1.msra.mxu0 %v1476
    %1602 = vmatprep.subr.mxu0 0.0
    %1603 = vmatpush1.msra.mxu0 %v1477
    %1604 = vmatprep.subr.mxu0 0.0
    %1605 = vmatpush1.msra.mxu0 %v1478
    %1606 = vmatprep.subr.mxu0 0.0
    %1607 = vmatpush1.msra.mxu0 %v1479
    %1608 = vmatprep.subr.mxu0 0.0
    %1609 = vmatpush1.msra.mxu0 %v1480
    %1610 = vmatprep.subr.mxu0 0.0
    %1611 = vmatpush1.msra.mxu0 %v1481
    %1612 = vmatprep.subr.mxu0 0.0
    %1613 = vmatpush1.msra.mxu0 %v1482
    %1614 = vmatprep.subr.mxu0 0.0
    %1615 = vmatpush1.msra.mxu0 %v1483
    %1616 = vmatprep.subr.mxu0 0.0
    %1617 = vmatpush1.msra.mxu0 %v1484
    %1618 = vmatprep.subr.mxu0 0.0
    %1619 = vmatpush1.msra.mxu0 %v1485
    %1620 = vmatprep.subr.mxu0 0.0
    %1621 = vmatpush1.msra.mxu0 %v1486
    %1622 = vmatprep.mubr.f32.mxu0 %v1450
    %1623 = vmatmul.mubr.f32.gmra.mrb[0].mxu0 %v1449
    %v1624 = vpop.f32.mrb[0].mxu0
    %v1625 = vadd.f32 %v1556, %v1624
    %v1626 = vpop.f32.mrb[0].mxu0
    %1627 = vdwg.mxu0
    %1628 = vmatprep.subr.mxu0 0.0
    %1629 = vmatpush1.msra.mxu0 %v1487
    %1630 = vmatprep.subr.mxu0 0.0
    %1631 = vmatpush1.msra.mxu0 %v1488
    %1632 = vmatprep.subr.mxu0 0.0
    %1633 = vmatpush1.msra.mxu0 %v1489
    %1634 = vmatprep.subr.mxu0 0.0
    %1635 = vmatpush1.msra.mxu0 %v1490
    %1636 = vmatprep.subr.mxu0 0.0
    %1637 = vmatpush1.msra.mxu0 %v1491
    %1638 = vmatprep.subr.mxu0 0.0
    %1639 = vmatpush1.msra.mxu0 %v1492
    %1640 = vmatprep.subr.mxu0 0.0
    %1641 = vmatpush1.msra.mxu0 %v1493
    %1642 = vmatprep.subr.mxu0 0.0
    %1643 = vmatpush1.msra.mxu0 %v1494
    %1644 = vmatprep.subr.mxu0 0.0
    %1645 = vmatpush1.msra.mxu0 %v1495
    %1646 = vmatprep.subr.mxu0 0.0
    %1647 = vmatpush1.msra.mxu0 %v1496
    %1648 = vmatprep.subr.mxu0 0.0
    %1649 = vmatpush1.msra.mxu0 %v1497
    %1650 = vmatprep.subr.mxu0 0.0
    %1651 = vmatpush1.msra.mxu0 %v1498
    %1652 = vmatprep.subr.mxu0 0.0
    %1653 = vmatpush1.msra.mxu0 %v1499
    %1654 = vmatprep.subr.mxu0 0.0
    %1655 = vmatpush1.msra.mxu0 %v1500
    %1656 = vmatprep.subr.mxu0 0.0
    %1657 = vmatpush1.msra.mxu0 %v1501
    %1658 = vmatprep.subr.mxu0 0.0
    %1659 = vmatpush1.msra.mxu0 %v1502
    %1660 = vmatprep.subr.mxu0 0.0
    %1661 = vmatpush1.msra.mxu0 %v1503
    %1662 = vmatprep.subr.mxu0 0.0
    %1663 = vmatpush1.msra.mxu0 %v1504
    %1664 = vmatprep.subr.mxu0 0.0
    %1665 = vmatpush1.msra.mxu0 %v1505
    %1666 = vmatprep.subr.mxu0 0.0
    %1667 = vmatpush1.msra.mxu0 %v1506
    %1668 = vmatprep.subr.mxu0 0.0
    %1669 = vmatpush1.msra.mxu0 %v1507
    %1670 = vmatprep.subr.mxu0 0.0
    %1671 = vmatpush1.msra.mxu0 %v1508
    %1672 = vmatprep.subr.mxu0 0.0
    %1673 = vmatpush1.msra.mxu0 %v1509
    %1674 = vmatprep.subr.mxu0 0.0
    %1675 = vmatpush1.msra.mxu0 %v1510
    %1676 = vmatprep.subr.mxu0 0.0
    %1677 = vmatpush1.msra.mxu0 %v1511
    %1678 = vmatprep.subr.mxu0 0.0
    %1679 = vmatpush1.msra.mxu0 %v1512
    %1680 = vmatprep.subr.mxu0 0.0
    %1681 = vmatpush1.msra.mxu0 %v1513
    %1682 = vmatprep.subr.mxu0 0.0
    %1683 = vmatpush1.msra.mxu0 %v1514
    %1684 = vmatprep.subr.mxu0 0.0
    %1685 = vmatpush1.msra.mxu0 %v1515
    %1686 = vmatprep.subr.mxu0 0.0
    %1687 = vmatpush1.msra.mxu0 %v1516
    %1688 = vmatprep.subr.mxu0 0.0
    %1689 = vmatpush1.msra.mxu0 %v1517
    %1690 = vmatprep.subr.mxu0 0.0
    %1691 = vmatpush1.msra.mxu0 %v1518
    %1692 = vmatprep.mubr.f32.mxu0 %v1452
    %1693 = vmatmul.mubr.f32.gmra.mrb[0].mxu0 %v1451
    %v1694 = vpop.f32.mrb[0].mxu0
    %v1695 = vadd.f32 %v1625, %v1694
    %v1696 = vpop.f32.mrb[0].mxu0
    %1697 = vdwg.mxu0
    %1698 = vmatprep.subr.mxu0 0.0
    %1699 = vmatpush1.msra.mxu0 %v1519
    %1700 = vmatprep.subr.mxu0 0.0
    %1701 = vmatpush1.msra.mxu0 %v1520
    %1702 = vmatprep.subr.mxu0 0.0
    %1703 = vmatpush1.msra.mxu0 %v1521
    %1704 = vmatprep.subr.mxu0 0.0
    %1705 = vmatpush1.msra.mxu0 %v1522
    %1706 = vmatprep.subr.mxu0 0.0
    %1707 = vmatpush1.msra.mxu0 %v1523
    %1708 = vmatprep.subr.mxu0 0.0
    %1709 = vmatpush1.msra.mxu0 %v1524
    %1710 = vmatprep.subr.mxu0 0.0
    %1711 = vmatpush1.msra.mxu0 %v1525
    %1712 = vmatprep.subr.mxu0 0.0
    %1713 = vmatpush1.msra.mxu0 %v1526
    %1714 = vmatprep.subr.mxu0 0.0
    %1715 = vmatpush1.msra.mxu0 %v1527
    %1716 = vmatprep.subr.mxu0 0.0
    %1717 = vmatpush1.msra.mxu0 %v1528
    %1718 = vmatprep.subr.mxu0 0.0
    %1719 = vmatpush1.msra.mxu0 %v1529
    %1720 = vmatprep.subr.mxu0 0.0
    %1721 = vmatpush1.msra.mxu0 %v1530
    %1722 = vmatprep.subr.mxu0 0.0
    %1723 = vmatpush1.msra.mxu0 %v1531
    %1724 = vmatprep.subr.mxu0 0.0
    %1725 = vmatpush1.msra.mxu0 %v1532
    %1726 = vmatprep.subr.mxu0 0.0
    %1727 = vmatpush1.msra.mxu0 %v1533
    %1728 = vmatprep.subr.mxu0 0.0
    %1729 = vmatpush1.msra.mxu0 %v1534
    %1730 = vmatprep.subr.mxu0 0.0
    %1731 = vmatpush1.msra.mxu0 %v1535
    %1732 = vmatprep.subr.mxu0 0.0
    %1733 = vmatpush1.msra.mxu0 %v1536
    %1734 = vmatprep.subr.mxu0 0.0
    %1735 = vmatpush1.msra.mxu0 %v1537
    %1736 = vmatprep.subr.mxu0 0.0
    %1737 = vmatpush1.msra.mxu0 %v1538
    %1738 = vmatprep.subr.mxu0 0.0
    %1739 = vmatpush1.msra.mxu0 %v1539
    %1740 = vmatprep.subr.mxu0 0.0
    %1741 = vmatpush1.msra.mxu0 %v1540
    %1742 = vmatprep.subr.mxu0 0.0
    %1743 = vmatpush1.msra.mxu0 %v1541
    %1744 = vmatprep.subr.mxu0 0.0
    %1745 = vmatpush1.msra.mxu0 %v1542
    %1746 = vmatprep.subr.mxu0 0.0
    %1747 = vmatpush1.msra.mxu0 %v1543
    %1748 = vmatprep.subr.mxu0 0.0
    %1749 = vmatpush1.msra.mxu0 %v1544
    %1750 = vmatprep.subr.mxu0 0.0
    %1751 = vmatpush1.msra.mxu0 %v1545
    %1752 = vmatprep.subr.mxu0 0.0
    %1753 = vmatpush1.msra.mxu0 %v1546
    %1754 = vmatprep.subr.mxu0 0.0
    %1755 = vmatpush1.msra.mxu0 %v1547
    %1756 = vmatprep.subr.mxu0 0.0
    %1757 = vmatpush1.msra.mxu0 %v1548
    %1758 = vmatprep.subr.mxu0 0.0
    %1759 = vmatpush1.msra.mxu0 %v1549
    %1760 = vmatprep.subr.mxu0 0.0
    %1761 = vmatpush1.msra.mxu0 %v1550
    %1762 = vmatprep.mubr.f32.mxu0 %v1454
    %1763 = vmatmul.mubr.f32.gmra.mrb[0].mxu0 %v1453
    %v1764 = vpop.f32.mrb[0].mxu0
    %v1765 = vadd.f32 %v1695, %v1764
    %v1766 = vpop.f32.mrb[0].mxu0
    %1767 = vdwg.mxu0
    %1768 = vst [vmem:[#allocation17] sm:$0x3] %v1765
    // Predicated region
    $region74: #{aux_head_imagenet_forward.1} parent=1 // pred_check
      _
    $region75: #{aux_head_imagenet_forward.1} parent=1 // pred_check_branch
      %1770 = sbr.rel (0) target = $region77
    $region76: #{aux_head_imagenet_forward.1} parent=1 // pred_region
      %s1772 = ssub.s32 32, 32
      %1773 = vsyncadd [#allocation4], %s1772
      %s1775 = sshll.u32 [#allocation17], 4
      %s1776 = int_to_ptr.vmem [resolvable:$true] %s1775
      %1778 = dma.vmem_to_hbm [thread:$0]  %s1776, 32, %s9, [#allocation4]
    $region77: #{aux_head_imagenet_forward.1} parent=1 // pred_fallthru
      _
    // Predicated region
    $region78: #{aux_head_imagenet_forward.1} parent=1 // pred_check
      _
    $region79: #{aux_head_imagenet_forward.1} parent=1 // pred_check_branch
      %1780 = sbr.rel (0) target = $region81
    $region80: #{aux_head_imagenet_forward.1} parent=1 // pred_region
      %1781 = dma.done [#allocation4], 32
    $region81: #{aux_head_imagenet_forward.1} parent=1 // pred_fallthru
      _
    %1782 = vsyncpa [#allocation3], 1
    %1783 = vsyncpa [#allocation6], 1
    %1784 = vsyncpa [#allocation9], 1
    %1785 = vsyncpa [#allocation12], 1
    %1786 = vsyncpa [#allocation15], 1
    %1787 = vsyncpa [#allocation4], 1

</llo_original>
